<compile_context>
chip_gen: v6e
topology: v6e:2x2x1
jax: 0.10.0
libtpu: 0.0.40
codegen_flags: <defaults>
</compile_context>

<pallas_src>
import functools

import jax
import jax.numpy as jnp
from jax import lax
from jax.experimental import pallas as pl
from jax.experimental.pallas import tpu as pltpu

SLAB = 128      # per-slab vocab width fed to the one-hot compare (lane / MXU aligned)
TILE_R = 512    # flattened rows per grid step (multiple of 128; output lane dim)

_COMPILER_PARAMS = pltpu.CompilerParams(
    dimension_semantics=("parallel",),          # independent row tiles -> megacore split
    vmem_limit_bytes=32 * 1024 * 1024,          # safe on v5e/v6e (128M) and v7x (64M)
)


def _round_up(x, m):
    return ((x + m - 1) // m) * m


# ----------------------------------------------------------------------------
# Kernel: one grid step = TILE_R flattened rows.
#   idx_ref: (n_slabs, TILE_R) int32  slab-local indices (values outside [0, SLAB)
#            are dropped -> contribute zero, which is how padding_idx=0 and the
#            row-padding sentinel -1 are handled)
#   tab_ref: (H, n_slabs*SLAB) f32    compacted, transposed table (resident over grid)
#   out_ref: (H, TILE_R) f32          transposed output tile (lane-dense store)
# Computes  out[:, r] = sum_s tab[:, s*SLAB + idx[s, r]]
# as one-hot @ table MXU matmuls with f32 accumulation.
# ----------------------------------------------------------------------------
def _embed_sum_kernel(idx_ref, tab_ref, out_ref):
    n_slabs, tr = idx_ref.shape
    h, k_total = tab_ref.shape
    slab = k_total // n_slabs

    # Hoisted out of the loop (JAX does not CSE broadcasts).
    iota = lax.broadcasted_iota(jnp.int32, (slab, tr), 0)
    acc = jnp.zeros((h, tr), jnp.float32)

    # Small static trip count (<= 13).  int32 compares: exact and safe on v5e
    # (no 16-bit VALU); TODO(synk): bf16 compares on chunk-local indices would
    # roughly halve compare vregs on v6e/v7x.
    for s in range(n_slabs):
        onehot = (iota == idx_ref[s:s + 1, :]).astype(jnp.float32)       # (SLAB, TILE_R)
        acc = acc + jnp.dot(tab_ref[:, s * slab:(s + 1) * slab], onehot,
                            preferred_element_type=jnp.float32)
    out_ref[...] = acc


# ----------------------------------------------------------------------------
# Wrapper-side slab plumbing
# ----------------------------------------------------------------------------
def _slab_plan(feature_offsets, feature_widths):
    """Expand per-feature (table_offset, used_width) into flat (feature, offset) slabs."""
    plan = []
    for f, (off, width) in enumerate(zip(feature_offsets, feature_widths)):
        for s in range(pl.cdiv(width, SLAB)):
            plan.append((f, off + s * SLAB))
    return plan


def _gather_slabs(table, plan):
    """Stack SLAB-row slices of `table` per plan entry -> (n_slabs*SLAB, H) f32."""
    v, h = table.shape
    need = max(off + SLAB for _, off in plan)
    table = table.astype(jnp.float32)
    if need > v:
        table = jnp.concatenate([table, jnp.zeros((need - v, h), jnp.float32)], axis=0)
    return jnp.concatenate([table[off:off + SLAB] for _, off in plan], axis=0)


def _local_index_rows(idx_rf, plan):
    """(R, F) indices -> (n_slabs, R) slab-local indices (may be negative / OOB)."""
    return jnp.stack([idx_rf[:, f] - off for f, off in plan], axis=0).astype(jnp.int32)


def _embedding_sum(idx_rows, table_slabs, hidden, num_rows):
    """Run the kernel.  idx_rows: (n_slabs, R) int32, table_slabs: (n_slabs*SLAB, H)."""
    n_slabs = idx_rows.shape[0]
    tile_r = min(TILE_R, _round_up(num_rows, 128))
    r_pad = _round_up(num_rows, tile_r)

    # Pad the row axis with -1: outside every slab's [0, SLAB) range -> contributes 0.
    idx_p = jnp.full((n_slabs, r_pad), -1, jnp.int32).at[:, :num_rows].set(idx_rows)
    tab_t = table_slabs.T                                   # (H, n_slabs*SLAB) f32
    k_total = tab_t.shape[1]

    out_t = pl.pallas_call(
        _embed_sum_kernel,
        out_shape=jax.ShapeDtypeStruct((hidden, r_pad), jnp.float32),
        grid=(r_pad // tile_r,),
        in_specs=[
            pl.BlockSpec((n_slabs, tile_r), lambda r: (0, r)),
            pl.BlockSpec((hidden, k_total), lambda r: (0, 0)),   # resident across grid
        ],
        out_specs=pl.BlockSpec((hidden, tile_r), lambda r: (0, r)),
        compiler_params=_COMPILER_PARAMS,
    )(idx_p, tab_t)

    # TODO(synk): in a fused pipeline hand the consumer the (H, R) transposed layout
    # directly instead of paying this extra transpose pass over the output.
    return out_t[:, :num_rows].T


# ----------------------------------------------------------------------------
# Public ops matching the module's forward
# ----------------------------------------------------------------------------
@functools.partial(jax.jit, static_argnames=("feature_width",))
def node_embed(atom_idx, degree_idx, atom_table, degree_table, *, feature_width=128):
    """atom_table[atom_idx].sum(-2) + degree_table[degree]  ->  (B, N, H) f32.

    feature_width: width of each atom feature's used vocab range within its 512-wide
    OGB segment (cardinality <= 119 for ogbg-mol*).  Indices beyond it inside a segment
    would be dropped silently -- pass feature_width=512 for full-segment coverage.
    """
    b, n, f = atom_idx.shape
    _, hidden = atom_table.shape
    vd, _ = degree_table.shape
    rows = b * n

    atom_plan = _slab_plan([512 * j for j in range(f)], [feature_width] * f)
    deg_plan = _slab_plan([0], [vd])                       # degree vocab fully covered

    idx_rows = jnp.concatenate(
        [_local_index_rows(atom_idx.reshape(rows, f).astype(jnp.int32), atom_plan),
         _local_index_rows(degree_idx.reshape(rows, 1).astype(jnp.int32), deg_plan)],
        axis=0)
    table_slabs = jnp.concatenate(
        [_gather_slabs(atom_table, atom_plan), _gather_slabs(degree_table, deg_plan)],
        axis=0)

    return _embedding_sum(idx_rows, table_slabs, hidden, rows).reshape(b, n, hidden)


@functools.partial(jax.jit, static_argnames=("feature_width",))
def edge_embed(edge_idx, edge_table, *, feature_width=128):
    """edge_table[edge_idx].sum(-2)  ->  (B, N, N, num_heads) f32."""
    b, n, n2, fe = edge_idx.shape
    _, nh = edge_table.shape
    rows = b * n * n2

    plan = _slab_plan([512 * j for j in range(fe)], [feature_width] * fe)
    idx_rows = _local_index_rows(edge_idx.reshape(rows, fe).astype(jnp.int32), plan)
    table_slabs = _gather_slabs(edge_table, plan)

    return _embedding_sum(idx_rows, table_slabs, nh, rows).reshape(b, n, n2, nh)


# ----------------------------------------------------------------------------
# Parameter construction (matches __init__ shapes for ogbg-molhiv)
# ----------------------------------------------------------------------------
def init_params(key, hidden_dim, num_heads, num_hops=5):
    ks = jax.random.split(key, 6)
    va = 512 * 9 + 1
    ve = 512 * 3 + 1
    vd = 512
    atom_table = jax.random.normal(ks[0], (va, hidden_dim), jnp.float32)
    edge_table = jax.random.normal(ks[1], (ve, num_heads), jnp.float32)
    degree_table = jax.random.normal(ks[2], (vd, hidden_dim), jnp.float32)
    # padding_idx=0 -> row 0 is zeros
    atom_table = atom_table.at[0].set(0.0)
    edge_table = edge_table.at[0].set(0.0)
    degree_table = degree_table.at[0].set(0.0)
    node_vnode = jax.random.normal(ks[3], (1, hidden_dim), jnp.float32)
    node_vnode_distance = jax.random.normal(ks[4], (1, num_heads), jnp.float32)
    # xavier_normal_ with gain=1.44
    std = 1.44 * (2.0 / (num_hops + num_heads)) ** 0.5
    node_diffusion_weight = std * jax.random.normal(ks[5], (num_hops, num_heads), jnp.float32)
    return dict(
        atom_table=atom_table,
        edge_table=edge_table,
        degree_table=degree_table,
        node_vnode=node_vnode,
        node_vnode_distance=node_vnode_distance,
        node_diffusion_weight=node_diffusion_weight,
    )


def node_edge_embedding_forward(x, params, *, feature_width=128):
    """Mirror of Node_Edge_Embedding.forward (eval mode: dropout = identity)."""
    node_data, edge_data = x[0], x[1]
    atom_idx = node_data[0]
    degree = node_data[-1]
    edge_idx = edge_data[0]

    node_features = node_embed(atom_idx, degree, params["atom_table"],
                               params["degree_table"], feature_width=feature_width)
    edge_features = edge_embed(edge_idx, params["edge_table"],
                               feature_width=feature_width)

    # input_dropout is identity in eval mode.
    node_vnode = params["node_vnode"]

    x0 = [node_features] + list(node_data[1:])
    x1 = [edge_features] + list(edge_data[1:])
    out = [x0, x1]

    # TODO(synk): `node_edge_switch.node_edge_features_switch` is external / undefined
    # in the reference source -- cannot be reproduced here.
    # TODO(synk): `graph_diffusion` (BFS_bias / explored / position_bias path) is
    # external and undefined in the reference source -- cannot be reproduced here.
    out.append([[node_vnode, params["node_vnode_distance"]],
                [None, None]])  # placeholder slot for [att_bias, explored]
    return out


# ----------------------------------------------------------------------------
if __name__ == "__main__":
    B, N = 2, 8
    F_ATOM, F_EDGE = 9, 3
    HIDDEN, HEADS, HOPS = 32, 8, 5

    key = jax.random.PRNGKey(0)
    k_p, k_a, k_d, k_e, k_pa, k_pe = jax.random.split(key, 6)

    params = init_params(k_p, HIDDEN, HEADS, HOPS)

    # OGB-style (convert_to_single_emb) indices: feature j lives in (512*j, 512*(j+1)),
    # 0 is the shared padding index (table row 0 is all zeros).
    atom_idx = (jax.random.randint(k_a, (B, N, F_ATOM), 1, 120, dtype=jnp.int32)
                + 512 * jnp.arange(F_ATOM, dtype=jnp.int32))
    atom_idx = jnp.where(jax.random.uniform(k_pa, (B, N, 1)) < 0.2, 0, atom_idx)
    degree = jax.random.randint(k_d, (B, N), 0, 512, dtype=jnp.int32)
    edge_idx = (jax.random.randint(k_e, (B, N, N, F_EDGE), 1, 10, dtype=jnp.int32)
                + 512 * jnp.arange(F_EDGE, dtype=jnp.int32))
    edge_idx = jnp.where(jax.random.uniform(k_pe, (B, N, N, 1)) < 0.2, 0, edge_idx)

    x = [[atom_idx, degree], [edge_idx]]

    out = node_edge_embedding_forward(x, params, feature_width=128)
    node_features = jax.block_until_ready(out[0][0])
    edge_features = jax.block_until_ready(out[1][0])

    # Exact plain-JAX f32 gather reference (kernel is f32 end-to-end now).
    ref_node = (jnp.take(params["atom_table"], atom_idx, axis=0).sum(-2)
                + jnp.take(params["degree_table"], degree, axis=0))
    ref_edge = jnp.take(params["edge_table"], edge_idx, axis=0).sum(-2)

    assert node_features.shape == (B, N, HIDDEN)
    assert edge_features.shape == (B, N, N, HEADS)
    assert jnp.allclose(node_features, ref_node, atol=1e-5, rtol=1e-5)
    assert jnp.allclose(edge_features, ref_edge, atol=1e-5, rtol=1e-5)

    # Full-segment coverage path (4 slabs per feature) must match as well.
    nf2 = node_embed(atom_idx, degree, params["atom_table"], params["degree_table"],
                     feature_width=512)
    ef2 = edge_embed(edge_idx, params["edge_table"], feature_width=512)
    assert jnp.allclose(jax.block_until_ready(nf2), ref_node, atol=1e-5, rtol=1e-5)
    assert jnp.allclose(jax.block_until_ready(ef2), ref_edge, atol=1e-5, rtol=1e-5)

    print("KERNEL_OK")
</pallas_src>

<mosaic_0001>
module attributes {stable_mosaic.version = 11 : i64} {
  func.func @_embed_sum_kernel(%arg0: i32, %arg1: memref<13x128xi32, #tpu.memory_space<vmem>>, %arg2: memref<32x1664xf32, #tpu.memory_space<vmem>>, %arg3: memref<32x128xf32, #tpu.memory_space<vmem>>) attributes {dimension_semantics = [#tpu.dimension_semantics<parallel>], iteration_bounds = array<i64: 1>, scalar_prefetch = 0 : i64, scratch_operands = 0 : i64, tpu.core_type = #tpu.core_type<tc>, window_params = [{transform_indices = @transform_0, window_bounds = array<i64: 13, 128>}, {pipeline_mode = #tpu.pipeline_mode<synchronous>, transform_indices = @transform_1, window_bounds = array<i64: 32, 1664>}, {transform_indices = @transform_2, window_bounds = array<i64: 32, 128>}]} {
    %0 = tpu.iota {dimensions = array<i32: 0>} : vector<128x128xi32>
    %cst = arith.constant 0.000000e+00 : f32
    %1 = vector.broadcast %cst : f32 to vector<32x128xf32>
    %c0 = arith.constant 0 : index
    %c0_0 = arith.constant 0 : index
    %2 = vector.load %arg1[%c0, %c0_0] : memref<13x128xi32, #tpu.memory_space<vmem>>, vector<1x128xi32>
    %3 = vector.broadcast %2 : vector<1x128xi32> to vector<128x128xi32>
    %4 = arith.cmpi eq, %0, %3 : vector<128x128xi32>
    %5 = arith.extui %4 : vector<128x128xi1> to vector<128x128xi32>
    %6 = arith.sitofp %5 : vector<128x128xi32> to vector<128x128xf32>
    %c0_1 = arith.constant 0 : index
    %c0_2 = arith.constant 0 : index
    %7 = vector.load %arg2[%c0_1, %c0_2] : memref<32x1664xf32, #tpu.memory_space<vmem>>, vector<32x128xf32>
    %cst_3 = arith.constant dense<0.000000e+00> : vector<32x128xf32>
    %8 = tpu.matmul %7, %6, %cst_3 {dimension_numbers = #tpu.dot_dimension_numbers<[1], [0], [0], [1], [0, 0, 1, 1], [], []>} : vector<32x128xf32>, vector<128x128xf32>, vector<32x128xf32> -> vector<32x128xf32>
    %9 = arith.addf %1, %8 : vector<32x128xf32>
    %c1 = arith.constant 1 : index
    %c0_4 = arith.constant 0 : index
    %10 = vector.load %arg1[%c1, %c0_4] : memref<13x128xi32, #tpu.memory_space<vmem>>, vector<1x128xi32>
    %11 = vector.broadcast %10 : vector<1x128xi32> to vector<128x128xi32>
    %12 = arith.cmpi eq, %0, %11 : vector<128x128xi32>
    %13 = arith.extui %12 : vector<128x128xi1> to vector<128x128xi32>
    %14 = arith.sitofp %13 : vector<128x128xi32> to vector<128x128xf32>
    %c0_5 = arith.constant 0 : index
    %c128 = arith.constant 128 : index
    %15 = vector.load %arg2[%c0_5, %c128] : memref<32x1664xf32, #tpu.memory_space<vmem>>, vector<32x128xf32>
    %cst_6 = arith.constant dense<0.000000e+00> : vector<32x128xf32>
    %16 = tpu.matmul %15, %14, %cst_6 {dimension_numbers = #tpu.dot_dimension_numbers<[1], [0], [0], [1], [0, 0, 1, 1], [], []>} : vector<32x128xf32>, vector<128x128xf32>, vector<32x128xf32> -> vector<32x128xf32>
    %17 = arith.addf %9, %16 : vector<32x128xf32>
    %c2 = arith.constant 2 : index
    %c0_7 = arith.constant 0 : index
    %18 = vector.load %arg1[%c2, %c0_7] : memref<13x128xi32, #tpu.memory_space<vmem>>, vector<1x128xi32>
    %19 = vector.broadcast %18 : vector<1x128xi32> to vector<128x128xi32>
    %20 = arith.cmpi eq, %0, %19 : vector<128x128xi32>
    %21 = arith.extui %20 : vector<128x128xi1> to vector<128x128xi32>
    %22 = arith.sitofp %21 : vector<128x128xi32> to vector<128x128xf32>
    %c0_8 = arith.constant 0 : index
    %c256 = arith.constant 256 : index
    %23 = vector.load %arg2[%c0_8, %c256] : memref<32x1664xf32, #tpu.memory_space<vmem>>, vector<32x128xf32>
    %cst_9 = arith.constant dense<0.000000e+00> : vector<32x128xf32>
    %24 = tpu.matmul %23, %22, %cst_9 {dimension_numbers = #tpu.dot_dimension_numbers<[1], [0], [0], [1], [0, 0, 1, 1], [], []>} : vector<32x128xf32>, vector<128x128xf32>, vector<32x128xf32> -> vector<32x128xf32>
    %25 = arith.addf %17, %24 : vector<32x128xf32>
    %c3 = arith.constant 3 : index
    %c0_10 = arith.constant 0 : index
    %26 = vector.load %arg1[%c3, %c0_10] : memref<13x128xi32, #tpu.memory_space<vmem>>, vector<1x128xi32>
    %27 = vector.broadcast %26 : vector<1x128xi32> to vector<128x128xi32>
    %28 = arith.cmpi eq, %0, %27 : vector<128x128xi32>
    %29 = arith.extui %28 : vector<128x128xi1> to vector<128x128xi32>
    %30 = arith.sitofp %29 : vector<128x128xi32> to vector<128x128xf32>
    %c0_11 = arith.constant 0 : index
    %c384 = arith.constant 384 : index
    %31 = vector.load %arg2[%c0_11, %c384] : memref<32x1664xf32, #tpu.memory_space<vmem>>, vector<32x128xf32>
    %cst_12 = arith.constant dense<0.000000e+00> : vector<32x128xf32>
    %32 = tpu.matmul %31, %30, %cst_12 {dimension_numbers = #tpu.dot_dimension_numbers<[1], [0], [0], [1], [0, 0, 1, 1], [], []>} : vector<32x128xf32>, vector<128x128xf32>, vector<32x128xf32> -> vector<32x128xf32>
    %33 = arith.addf %25, %32 : vector<32x128xf32>
    %c4 = arith.constant 4 : index
    %c0_13 = arith.constant 0 : index
    %34 = vector.load %arg1[%c4, %c0_13] : memref<13x128xi32, #tpu.memory_space<vmem>>, vector<1x128xi32>
    %35 = vector.broadcast %34 : vector<1x128xi32> to vector<128x128xi32>
    %36 = arith.cmpi eq, %0, %35 : vector<128x128xi32>
    %37 = arith.extui %36 : vector<128x128xi1> to vector<128x128xi32>
    %38 = arith.sitofp %37 : vector<128x128xi32> to vector<128x128xf32>
    %c0_14 = arith.constant 0 : index
    %c512 = arith.constant 512 : index
    %39 = vector.load %arg2[%c0_14, %c512] : memref<32x1664xf32, #tpu.memory_space<vmem>>, vector<32x128xf32>
    %cst_15 = arith.constant dense<0.000000e+00> : vector<32x128xf32>
    %40 = tpu.matmul %39, %38, %cst_15 {dimension_numbers = #tpu.dot_dimension_numbers<[1], [0], [0], [1], [0, 0, 1, 1], [], []>} : vector<32x128xf32>, vector<128x128xf32>, vector<32x128xf32> -> vector<32x128xf32>
    %41 = arith.addf %33, %40 : vector<32x128xf32>
    %c5 = arith.constant 5 : index
    %c0_16 = arith.constant 0 : index
    %42 = vector.load %arg1[%c5, %c0_16] : memref<13x128xi32, #tpu.memory_space<vmem>>, vector<1x128xi32>
    %43 = vector.broadcast %42 : vector<1x128xi32> to vector<128x128xi32>
    %44 = arith.cmpi eq, %0, %43 : vector<128x128xi32>
    %45 = arith.extui %44 : vector<128x128xi1> to vector<128x128xi32>
    %46 = arith.sitofp %45 : vector<128x128xi32> to vector<128x128xf32>
    %c0_17 = arith.constant 0 : index
    %c640 = arith.constant 640 : index
    %47 = vector.load %arg2[%c0_17, %c640] : memref<32x1664xf32, #tpu.memory_space<vmem>>, vector<32x128xf32>
    %cst_18 = arith.constant dense<0.000000e+00> : vector<32x128xf32>
    %48 = tpu.matmul %47, %46, %cst_18 {dimension_numbers = #tpu.dot_dimension_numbers<[1], [0], [0], [1], [0, 0, 1, 1], [], []>} : vector<32x128xf32>, vector<128x128xf32>, vector<32x128xf32> -> vector<32x128xf32>
    %49 = arith.addf %41, %48 : vector<32x128xf32>
    %c6 = arith.constant 6 : index
    %c0_19 = arith.constant 0 : index
    %50 = vector.load %arg1[%c6, %c0_19] : memref<13x128xi32, #tpu.memory_space<vmem>>, vector<1x128xi32>
    %51 = vector.broadcast %50 : vector<1x128xi32> to vector<128x128xi32>
    %52 = arith.cmpi eq, %0, %51 : vector<128x128xi32>
    %53 = arith.extui %52 : vector<128x128xi1> to vector<128x128xi32>
    %54 = arith.sitofp %53 : vector<128x128xi32> to vector<128x128xf32>
    %c0_20 = arith.constant 0 : index
    %c768 = arith.constant 768 : index
    %55 = vector.load %arg2[%c0_20, %c768] : memref<32x1664xf32, #tpu.memory_space<vmem>>, vector<32x128xf32>
    %cst_21 = arith.constant dense<0.000000e+00> : vector<32x128xf32>
    %56 = tpu.matmul %55, %54, %cst_21 {dimension_numbers = #tpu.dot_dimension_numbers<[1], [0], [0], [1], [0, 0, 1, 1], [], []>} : vector<32x128xf32>, vector<128x128xf32>, vector<32x128xf32> -> vector<32x128xf32>
    %57 = arith.addf %49, %56 : vector<32x128xf32>
    %c7 = arith.constant 7 : index
    %c0_22 = arith.constant 0 : index
    %58 = vector.load %arg1[%c7, %c0_22] : memref<13x128xi32, #tpu.memory_space<vmem>>, vector<1x128xi32>
    %59 = vector.broadcast %58 : vector<1x128xi32> to vector<128x128xi32>
    %60 = arith.cmpi eq, %0, %59 : vector<128x128xi32>
    %61 = arith.extui %60 : vector<128x128xi1> to vector<128x128xi32>
    %62 = arith.sitofp %61 : vector<128x128xi32> to vector<128x128xf32>
    %c0_23 = arith.constant 0 : index
    %c896 = arith.constant 896 : index
    %63 = vector.load %arg2[%c0_23, %c896] : memref<32x1664xf32, #tpu.memory_space<vmem>>, vector<32x128xf32>
    %cst_24 = arith.constant dense<0.000000e+00> : vector<32x128xf32>
    %64 = tpu.matmul %63, %62, %cst_24 {dimension_numbers = #tpu.dot_dimension_numbers<[1], [0], [0], [1], [0, 0, 1, 1], [], []>} : vector<32x128xf32>, vector<128x128xf32>, vector<32x128xf32> -> vector<32x128xf32>
    %65 = arith.addf %57, %64 : vector<32x128xf32>
    %c8 = arith.constant 8 : index
    %c0_25 = arith.constant 0 : index
    %66 = vector.load %arg1[%c8, %c0_25] : memref<13x128xi32, #tpu.memory_space<vmem>>, vector<1x128xi32>
    %67 = vector.broadcast %66 : vector<1x128xi32> to vector<128x128xi32>
    %68 = arith.cmpi eq, %0, %67 : vector<128x128xi32>
    %69 = arith.extui %68 : vector<128x128xi1> to vector<128x128xi32>
    %70 = arith.sitofp %69 : vector<128x128xi32> to vector<128x128xf32>
    %c0_26 = arith.constant 0 : index
    %c1024 = arith.constant 1024 : index
    %71 = vector.load %arg2[%c0_26, %c1024] : memref<32x1664xf32, #tpu.memory_space<vmem>>, vector<32x128xf32>
    %cst_27 = arith.constant dense<0.000000e+00> : vector<32x128xf32>
    %72 = tpu.matmul %71, %70, %cst_27 {dimension_numbers = #tpu.dot_dimension_numbers<[1], [0], [0], [1], [0, 0, 1, 1], [], []>} : vector<32x128xf32>, vector<128x128xf32>, vector<32x128xf32> -> vector<32x128xf32>
    %73 = arith.addf %65, %72 : vector<32x128xf32>
    %c9 = arith.constant 9 : index
    %c0_28 = arith.constant 0 : index
    %74 = vector.load %arg1[%c9, %c0_28] : memref<13x128xi32, #tpu.memory_space<vmem>>, vector<1x128xi32>
    %75 = vector.broadcast %74 : vector<1x128xi32> to vector<128x128xi32>
    %76 = arith.cmpi eq, %0, %75 : vector<128x128xi32>
    %77 = arith.extui %76 : vector<128x128xi1> to vector<128x128xi32>
    %78 = arith.sitofp %77 : vector<128x128xi32> to vector<128x128xf32>
    %c0_29 = arith.constant 0 : index
    %c1152 = arith.constant 1152 : index
    %79 = vector.load %arg2[%c0_29, %c1152] : memref<32x1664xf32, #tpu.memory_space<vmem>>, vector<32x128xf32>
    %cst_30 = arith.constant dense<0.000000e+00> : vector<32x128xf32>
    %80 = tpu.matmul %79, %78, %cst_30 {dimension_numbers = #tpu.dot_dimension_numbers<[1], [0], [0], [1], [0, 0, 1, 1], [], []>} : vector<32x128xf32>, vector<128x128xf32>, vector<32x128xf32> -> vector<32x128xf32>
    %81 = arith.addf %73, %80 : vector<32x128xf32>
    %c10 = arith.constant 10 : index
    %c0_31 = arith.constant 0 : index
    %82 = vector.load %arg1[%c10, %c0_31] : memref<13x128xi32, #tpu.memory_space<vmem>>, vector<1x128xi32>
    %83 = vector.broadcast %82 : vector<1x128xi32> to vector<128x128xi32>
    %84 = arith.cmpi eq, %0, %83 : vector<128x128xi32>
    %85 = arith.extui %84 : vector<128x128xi1> to vector<128x128xi32>
    %86 = arith.sitofp %85 : vector<128x128xi32> to vector<128x128xf32>
    %c0_32 = arith.constant 0 : index
    %c1280 = arith.constant 1280 : index
    %87 = vector.load %arg2[%c0_32, %c1280] : memref<32x1664xf32, #tpu.memory_space<vmem>>, vector<32x128xf32>
    %cst_33 = arith.constant dense<0.000000e+00> : vector<32x128xf32>
    %88 = tpu.matmul %87, %86, %cst_33 {dimension_numbers = #tpu.dot_dimension_numbers<[1], [0], [0], [1], [0, 0, 1, 1], [], []>} : vector<32x128xf32>, vector<128x128xf32>, vector<32x128xf32> -> vector<32x128xf32>
    %89 = arith.addf %81, %88 : vector<32x128xf32>
    %c11 = arith.constant 11 : index
    %c0_34 = arith.constant 0 : index
    %90 = vector.load %arg1[%c11, %c0_34] : memref<13x128xi32, #tpu.memory_space<vmem>>, vector<1x128xi32>
    %91 = vector.broadcast %90 : vector<1x128xi32> to vector<128x128xi32>
    %92 = arith.cmpi eq, %0, %91 : vector<128x128xi32>
    %93 = arith.extui %92 : vector<128x128xi1> to vector<128x128xi32>
    %94 = arith.sitofp %93 : vector<128x128xi32> to vector<128x128xf32>
    %c0_35 = arith.constant 0 : index
    %c1408 = arith.constant 1408 : index
    %95 = vector.load %arg2[%c0_35, %c1408] : memref<32x1664xf32, #tpu.memory_space<vmem>>, vector<32x128xf32>
    %cst_36 = arith.constant dense<0.000000e+00> : vector<32x128xf32>
    %96 = tpu.matmul %95, %94, %cst_36 {dimension_numbers = #tpu.dot_dimension_numbers<[1], [0], [0], [1], [0, 0, 1, 1], [], []>} : vector<32x128xf32>, vector<128x128xf32>, vector<32x128xf32> -> vector<32x128xf32>
    %97 = arith.addf %89, %96 : vector<32x128xf32>
    %c12 = arith.constant 12 : index
    %c0_37 = arith.constant 0 : index
    %98 = vector.load %arg1[%c12, %c0_37] : memref<13x128xi32, #tpu.memory_space<vmem>>, vector<1x128xi32>
    %99 = vector.broadcast %98 : vector<1x128xi32> to vector<128x128xi32>
    %100 = arith.cmpi eq, %0, %99 : vector<128x128xi32>
    %101 = arith.extui %100 : vector<128x128xi1> to vector<128x128xi32>
    %102 = arith.sitofp %101 : vector<128x128xi32> to vector<128x128xf32>
    %c0_38 = arith.constant 0 : index
    %c1536 = arith.constant 1536 : index
    %103 = vector.load %arg2[%c0_38, %c1536] : memref<32x1664xf32, #tpu.memory_space<vmem>>, vector<32x128xf32>
    %cst_39 = arith.constant dense<0.000000e+00> : vector<32x128xf32>
    %104 = tpu.matmul %103, %102, %cst_39 {dimension_numbers = #tpu.dot_dimension_numbers<[1], [0], [0], [1], [0, 0, 1, 1], [], []>} : vector<32x128xf32>, vector<128x128xf32>, vector<32x128xf32> -> vector<32x128xf32>
    %105 = arith.addf %97, %104 : vector<32x128xf32>
    %c0_40 = arith.constant 0 : index
    %c0_41 = arith.constant 0 : index
    %106 = vector.load %arg3[%c0_40, %c0_41] : memref<32x128xf32, #tpu.memory_space<vmem>>, vector<32x128xf32>
    tpu.vector_store %arg3[%c0_40, %c0_41], %105 {strides = array<i32>} : memref<32x128xf32, #tpu.memory_space<vmem>>, vector<32x128xf32>,
    return
  }
  func.func @transform_0(%arg0: i32) -> (i32, i32) {
    %c0_i32 = arith.constant 0 : i32
    %c0_i32_0 = arith.constant 0 : i32
    return %c0_i32, %arg0 : i32, i32
  }
  func.func @transform_1(%arg0: i32) -> (i32, i32) {
    %c0_i32 = arith.constant 0 : i32
    %c0_i32_0 = arith.constant 0 : i32
    %c0_i32_1 = arith.constant 0 : i32
    return %c0_i32, %c0_i32_0 : i32, i32
  }
  func.func @transform_2(%arg0: i32) -> (i32, i32) {
    %c0_i32 = arith.constant 0 : i32
    %c0_i32_0 = arith.constant 0 : i32
    return %c0_i32, %arg0 : i32, i32
  }
}

</mosaic_0001>

<llo_original>
// kernel: node_embed.1
$region0: #{node_embed.1}
  #allocation0 [shape = 'u32[]', space=smem, size = 0x4, offset = 0x4, fixed_abs, tag = 'smem constant byte address 0x4 - core index']
  #allocation1 [shape = 'u32[144,128]{1,0:T(1,128)}', space=vmem, size = 0x12000, scoped, tag = 'internal scratch']
  %s0 = inlined_call_operand.vmem [shape: s32[13,128], index: 0, kind: input, shape index: {}]
  %s1 = inlined_call_operand.vmem [shape: f32[32,1664], index: 1, kind: input, shape index: {}]
  %s2 = inlined_call_operand.vmem [shape: f32[32,128], index: 2, kind: output, shape index: {}]
  %s3 = sld [smem:[#allocation0]]
  $region18: #{node_embed.1} parent=0
    _
  %s5 = ssub.s32 1, %s3
  %s6 = scalar_select 0, %s5, %s3
  // Predicated region
  $region2: #{node_embed.1} parent=0 // pred_check
    _
  $region3: #{node_embed.1} parent=0 // pred_check_branch
    %8 = sbr.rel (0) target = $region5
  $region4: #{node_embed.1} parent=0 // pred_region
    _
  $region5: #{node_embed.1} parent=0 // pred_fallthru
    _
  // Predicated region
  $region6: #{node_embed.1} parent=0 // pred_check
    _
  $region7: #{node_embed.1} parent=0 // pred_check_branch
    %10 = sbr.rel (0) target = $region9
  $region8: #{node_embed.1} parent=0 // pred_region
    _
  $region9: #{node_embed.1} parent=0 // pred_fallthru
    _
  %v11 = vlaneseq
  %v12 = vshrl.u32 %v11, 7
  %v13 = vadd.s32 %v12, 8
  %v14 = vadd.s32 %v12, 16
  %v15 = vadd.s32 %v12, 24
  %v16 = vadd.s32 %v12, 32
  %v17 = vadd.s32 %v12, 40
  %v18 = vadd.s32 %v12, 48
  %v19 = vadd.s32 %v12, 56
  %v20 = vadd.s32 %v12, 64
  %v21 = vadd.s32 %v12, 72
  %v22 = vadd.s32 %v12, 80
  %v23 = vadd.s32 %v12, 88
  %v24 = vadd.s32 %v12, 96
  %v25 = vadd.s32 %v12, 104
  %v26 = vadd.s32 %v12, 112
  %v27 = vadd.s32 %v12, 120
  %v28 = vld [vmem:[%s0] sm:$0x1]
  %v29 = vlaneseq
  %v30 = vshrl.u32 %v29, 7
  %v31 = vsub.s32 0, %v30
  %v32 = vrot.slane %v28, %v31
  %vm33 = vcmp.eq.s32.totalorder %v12, %v32
  %vm34 = vcmp.eq.s32.totalorder %v13, %v32
  %vm35 = vcmp.eq.s32.totalorder %v14, %v32
  %vm36 = vcmp.eq.s32.totalorder %v15, %v32
  %vm37 = vcmp.eq.s32.totalorder %v16, %v32
  %vm38 = vcmp.eq.s32.totalorder %v17, %v32
  %vm39 = vcmp.eq.s32.totalorder %v18, %v32
  %vm40 = vcmp.eq.s32.totalorder %v19, %v32
  %vm41 = vcmp.eq.s32.totalorder %v20, %v32
  %vm42 = vcmp.eq.s32.totalorder %v21, %v32
  %vm43 = vcmp.eq.s32.totalorder %v22, %v32
  %vm44 = vcmp.eq.s32.totalorder %v23, %v32
  %vm45 = vcmp.eq.s32.totalorder %v24, %v32
  %vm46 = vcmp.eq.s32.totalorder %v25, %v32
  %vm47 = vcmp.eq.s32.totalorder %v26, %v32
  %vm48 = vcmp.eq.s32.totalorder %v27, %v32
  %v49 = vsel %vm33, 1, 0
  %v50 = vsel %vm34, 1, 0
  %v51 = vsel %vm35, 1, 0
  %v52 = vsel %vm36, 1, 0
  %v53 = vsel %vm37, 1, 0
  %v54 = vsel %vm38, 1, 0
  %v55 = vsel %vm39, 1, 0
  %v56 = vsel %vm40, 1, 0
  %v57 = vsel %vm41, 1, 0
  %v58 = vsel %vm42, 1, 0
  %v59 = vsel %vm43, 1, 0
  %v60 = vsel %vm44, 1, 0
  %v61 = vsel %vm45, 1, 0
  %v62 = vsel %vm46, 1, 0
  %v63 = vsel %vm47, 1, 0
  %v64 = vsel %vm48, 1, 0
  %v65 = vcvt.s32.f32 %v49
  %v66 = vcvt.s32.f32 %v50
  %v67 = vcvt.s32.f32 %v51
  %v68 = vcvt.s32.f32 %v52
  %v69 = vcvt.s32.f32 %v53
  %v70 = vcvt.s32.f32 %v54
  %v71 = vcvt.s32.f32 %v55
  %v72 = vcvt.s32.f32 %v56
  %v73 = vcvt.s32.f32 %v57
  %v74 = vcvt.s32.f32 %v58
  %v75 = vcvt.s32.f32 %v59
  %v76 = vcvt.s32.f32 %v60
  %v77 = vcvt.s32.f32 %v61
  %v78 = vcvt.s32.f32 %v62
  %v79 = vcvt.s32.f32 %v63
  %v80 = vcvt.s32.f32 %v64
  %v81 = vld [vmem:[%s1] sm:$0xff]
  %v82 = vld [vmem:[%s1 + $0x68] sm:$0xff]
  %v83 = vld [vmem:[%s1 + $0xd0] sm:$0xff]
  %v84 = vld [vmem:[%s1 + $0x138] sm:$0xff]
  %v85 = vld [vmem:[%s0 + $0x1] sm:$0x1]
  %v86 = vlaneseq
  %v87 = vshrl.u32 %v86, 7
  %v88 = vsub.s32 0, %v87
  %v89 = vrot.slane %v85, %v88
  %vm90 = vcmp.eq.s32.totalorder %v12, %v89
  %vm91 = vcmp.eq.s32.totalorder %v13, %v89
  %vm92 = vcmp.eq.s32.totalorder %v14, %v89
  %vm93 = vcmp.eq.s32.totalorder %v15, %v89
  %vm94 = vcmp.eq.s32.totalorder %v16, %v89
  %vm95 = vcmp.eq.s32.totalorder %v17, %v89
  %vm96 = vcmp.eq.s32.totalorder %v18, %v89
  %vm97 = vcmp.eq.s32.totalorder %v19, %v89
  %vm98 = vcmp.eq.s32.totalorder %v20, %v89
  %vm99 = vcmp.eq.s32.totalorder %v21, %v89
  %vm100 = vcmp.eq.s32.totalorder %v22, %v89
  %vm101 = vcmp.eq.s32.totalorder %v23, %v89
  %vm102 = vcmp.eq.s32.totalorder %v24, %v89
  %vm103 = vcmp.eq.s32.totalorder %v25, %v89
  %vm104 = vcmp.eq.s32.totalorder %v26, %v89
  %vm105 = vcmp.eq.s32.totalorder %v27, %v89
  %v106 = vsel %vm90, 1, 0
  %v107 = vsel %vm91, 1, 0
  %v108 = vsel %vm92, 1, 0
  %v109 = vsel %vm93, 1, 0
  %v110 = vsel %vm94, 1, 0
  %v111 = vsel %vm95, 1, 0
  %v112 = vsel %vm96, 1, 0
  %v113 = vsel %vm97, 1, 0
  %v114 = vsel %vm98, 1, 0
  %v115 = vsel %vm99, 1, 0
  %v116 = vsel %vm100, 1, 0
  %v117 = vsel %vm101, 1, 0
  %v118 = vsel %vm102, 1, 0
  %v119 = vsel %vm103, 1, 0
  %v120 = vsel %vm104, 1, 0
  %v121 = vsel %vm105, 1, 0
  %v122 = vcvt.s32.f32 %v106
  %v123 = vcvt.s32.f32 %v107
  %v124 = vcvt.s32.f32 %v108
  %v125 = vcvt.s32.f32 %v109
  %v126 = vcvt.s32.f32 %v110
  %v127 = vcvt.s32.f32 %v111
  %v128 = vcvt.s32.f32 %v112
  %v129 = vcvt.s32.f32 %v113
  %v130 = vcvt.s32.f32 %v114
  %v131 = vcvt.s32.f32 %v115
  %v132 = vcvt.s32.f32 %v116
  %v133 = vcvt.s32.f32 %v117
  %v134 = vcvt.s32.f32 %v118
  %v135 = vcvt.s32.f32 %v119
  %v136 = vcvt.s32.f32 %v120
  %v137 = vcvt.s32.f32 %v121
  %v138 = vld [vmem:[%s1 + $0x8] sm:$0xff]
  %v139 = vld [vmem:[%s1 + $0x70] sm:$0xff]
  %v140 = vld [vmem:[%s1 + $0xd8] sm:$0xff]
  %v141 = vld [vmem:[%s1 + $0x140] sm:$0xff]
  %142 = vmatprep.subr.mxu0 0.0
  %143 = vmatpush1.msra.mxu0 %v137
  %144 = vmatprep.subr.mxu0 0.0
  %145 = vmatpush1.msra.mxu0 %v136
  %146 = vmatprep.subr.mxu0 0.0
  %147 = vmatpush1.msra.mxu0 %v135
  %148 = vmatprep.subr.mxu0 0.0
  %149 = vmatpush1.msra.mxu0 %v134
  %150 = vmatprep.subr.mxu0 0.0
  %151 = vmatpush1.msra.mxu0 %v133
  %152 = vmatprep.subr.mxu0 0.0
  %153 = vmatpush1.msra.mxu0 %v132
  %154 = vmatprep.subr.mxu0 0.0
  %155 = vmatpush1.msra.mxu0 %v131
  %156 = vmatprep.subr.mxu0 0.0
  %157 = vmatpush1.msra.mxu0 %v130
  %158 = vmatprep.subr.mxu0 0.0
  %159 = vmatpush1.msra.mxu0 %v129
  %160 = vmatprep.subr.mxu0 0.0
  %161 = vmatpush1.msra.mxu0 %v128
  %162 = vmatprep.subr.mxu0 0.0
  %163 = vmatpush1.msra.mxu0 %v127
  %164 = vmatprep.subr.mxu0 0.0
  %165 = vmatpush1.msra.mxu0 %v126
  %166 = vmatprep.subr.mxu0 0.0
  %167 = vmatpush1.msra.mxu0 %v125
  %168 = vmatprep.subr.mxu0 0.0
  %169 = vmatpush1.msra.mxu0 %v124
  %170 = vmatprep.subr.mxu0 0.0
  %171 = vmatpush1.msra.mxu0 %v123
  %172 = vmatprep.subr.mxu0 0.0
  %173 = vmatpush1.msra.mxu0 %v122
  %174 = vmatprep.subr.mxu0 0.0
  %175 = vmatpush2.msra.mxu0 0.0
  %176 = vmatprep.subr.mxu0 0.0
  %177 = vmatpush2.msra.mxu0 0.0
  %178 = vmatprep.subr.mxu0 0.0
  %179 = vmatpush2.msra.mxu0 0.0
  %180 = vmatprep.subr.mxu0 0.0
  %181 = vmatpush2.msra.mxu0 0.0
  %182 = vmatprep.subr.mxu0 0.0
  %183 = vmatpush2.msra.mxu0 0.0
  %184 = vmatprep.subr.mxu0 0.0
  %185 = vmatpush2.msra.mxu0 0.0
  %186 = vmatprep.subr.mxu0 0.0
  %187 = vmatpush2.msra.mxu0 0.0
  %188 = vmatprep.subr.mxu0 0.0
  %189 = vmatpush2.msra.mxu0 0.0
  %190 = vmatprep.subr.mxu0 0.0
  %191 = vmatpush2.msra.mxu0 0.0
  %192 = vmatprep.subr.mxu0 0.0
  %193 = vmatpush2.msra.mxu0 0.0
  %194 = vmatprep.subr.mxu0 0.0
  %195 = vmatpush2.msra.mxu0 0.0
  %196 = vmatprep.subr.mxu0 0.0
  %197 = vmatpush2.msra.mxu0 0.0
  %198 = vmatprep.subr.mxu0 0.0
  %199 = vmatpush2.msra.mxu0 0.0
  %200 = vmatprep.subr.mxu0 0.0
  %201 = vmatpush2.msra.mxu0 0.0
  %202 = vmatprep.subr.mxu0 0.0
  %203 = vmatpush2.msra.mxu0 0.0
  %204 = vmatprep.subr.mxu0 0.0
  %205 = vmatpush2.msra.mxu0 0.0
  %206 = vmatprep.mubr.f32.mxu0 0.0
  %207 = vmatmul.mubr.f32.gmra.mxu0 %v138
  %v208 = vpop.f32.mrf.mxu0
  %v209 = vadd.f32 0.0, %v208
  %v210 = vpop.f32.mrf.mxu0
  %211 = vmatprep.mubr.f32.mxu0 0.0
  %212 = vmatmul.mubr.f32.gmra.mxu0 %v139
  %v213 = vpop.f32.mrf.mxu0
  %v214 = vadd.f32 0.0, %v213
  %v215 = vpop.f32.mrf.mxu0
  %216 = vmatprep.mubr.f32.mxu0 0.0
  %217 = vmatmul.mubr.f32.gmra.mxu0 %v140
  %v218 = vpop.f32.mrf.mxu0
  %v219 = vadd.f32 0.0, %v218
  %v220 = vpop.f32.mrf.mxu0
  %221 = vmatprep.mubr.f32.mxu0 0.0
  %222 = vmatmul.mubr.f32.gmra.mxu0 %v141
  %v223 = vpop.f32.mrf.mxu0
  %v224 = vadd.f32 0.0, %v223
  %v225 = vpop.f32.mrf.mxu0
  %226 = vdwg.mxu0
  %227 = vmatprep.subr.mxu0 0.0
  %228 = vmatpush1.msra.mxu0 %v80
  %229 = vmatprep.subr.mxu0 0.0
  %230 = vmatpush1.msra.mxu0 %v79
  %231 = vmatprep.subr.mxu0 0.0
  %232 = vmatpush1.msra.mxu0 %v78
  %233 = vmatprep.subr.mxu0 0.0
  %234 = vmatpush1.msra.mxu0 %v77
  %235 = vmatprep.subr.mxu0 0.0
  %236 = vmatpush1.msra.mxu0 %v76
  %237 = vmatprep.subr.mxu0 0.0
  %238 = vmatpush1.msra.mxu0 %v75
  %239 = vmatprep.subr.mxu0 0.0
  %240 = vmatpush1.msra.mxu0 %v74
  %241 = vmatprep.subr.mxu0 0.0
  %242 = vmatpush1.msra.mxu0 %v73
  %243 = vmatprep.subr.mxu0 0.0
  %244 = vmatpush1.msra.mxu0 %v72
  %245 = vmatprep.subr.mxu0 0.0
  %246 = vmatpush1.msra.mxu0 %v71
  %247 = vmatprep.subr.mxu0 0.0
  %248 = vmatpush1.msra.mxu0 %v70
  %249 = vmatprep.subr.mxu0 0.0
  %250 = vmatpush1.msra.mxu0 %v69
  %251 = vmatprep.subr.mxu0 0.0
  %252 = vmatpush1.msra.mxu0 %v68
  %253 = vmatprep.subr.mxu0 0.0
  %254 = vmatpush1.msra.mxu0 %v67
  %255 = vmatprep.subr.mxu0 0.0
  %256 = vmatpush1.msra.mxu0 %v66
  %257 = vmatprep.subr.mxu0 0.0
  %258 = vmatpush1.msra.mxu0 %v65
  %259 = vmatprep.subr.mxu0 0.0
  %260 = vmatpush2.msra.mxu0 0.0
  %261 = vmatprep.subr.mxu0 0.0
  %262 = vmatpush2.msra.mxu0 0.0
  %263 = vmatprep.subr.mxu0 0.0
  %264 = vmatpush2.msra.mxu0 0.0
  %265 = vmatprep.subr.mxu0 0.0
  %266 = vmatpush2.msra.mxu0 0.0
  %267 = vmatprep.subr.mxu0 0.0
  %268 = vmatpush2.msra.mxu0 0.0
  %269 = vmatprep.subr.mxu0 0.0
  %270 = vmatpush2.msra.mxu0 0.0
  %271 = vmatprep.subr.mxu0 0.0
  %272 = vmatpush2.msra.mxu0 0.0
  %273 = vmatprep.subr.mxu0 0.0
  %274 = vmatpush2.msra.mxu0 0.0
  %275 = vmatprep.subr.mxu0 0.0
  %276 = vmatpush2.msra.mxu0 0.0
  %277 = vmatprep.subr.mxu0 0.0
  %278 = vmatpush2.msra.mxu0 0.0
  %279 = vmatprep.subr.mxu0 0.0
  %280 = vmatpush2.msra.mxu0 0.0
  %281 = vmatprep.subr.mxu0 0.0
  %282 = vmatpush2.msra.mxu0 0.0
  %283 = vmatprep.subr.mxu0 0.0
  %284 = vmatpush2.msra.mxu0 0.0
  %285 = vmatprep.subr.mxu0 0.0
  %286 = vmatpush2.msra.mxu0 0.0
  %287 = vmatprep.subr.mxu0 0.0
  %288 = vmatpush2.msra.mxu0 0.0
  %289 = vmatprep.subr.mxu0 0.0
  %290 = vmatpush2.msra.mxu0 0.0
  %291 = vmatprep.mubr.f32.mxu0 0.0
  %292 = vmatmul.mubr.f32.gmra.mxu0 %v81
  %v293 = vpop.f32.mrf.mxu0
  %v294 = vadd.f32 %v209, %v293
  %v295 = vpop.f32.mrf.mxu0
  %296 = vmatprep.mubr.f32.mxu0 0.0
  %297 = vmatmul.mubr.f32.gmra.mxu0 %v82
  %v298 = vpop.f32.mrf.mxu0
  %v299 = vadd.f32 %v214, %v298
  %v300 = vpop.f32.mrf.mxu0
  %301 = vmatprep.mubr.f32.mxu0 0.0
  %302 = vmatmul.mubr.f32.gmra.mxu0 %v83
  %v303 = vpop.f32.mrf.mxu0
  %v304 = vadd.f32 %v219, %v303
  %v305 = vpop.f32.mrf.mxu0
  %306 = vmatprep.mubr.f32.mxu0 0.0
  %307 = vmatmul.mubr.f32.gmra.mxu0 %v84
  %v308 = vpop.f32.mrf.mxu0
  %v309 = vadd.f32 %v224, %v308
  %v310 = vpop.f32.mrf.mxu0
  %311 = vdwg.mxu0
  %v312 = vld [vmem:[%s0 + $0x2] sm:$0x1]
  %v313 = vlaneseq
  %v314 = vshrl.u32 %v313, 7
  %v315 = vsub.s32 0, %v314
  %v316 = vrot.slane %v312, %v315
  %vm317 = vcmp.eq.s32.totalorder %v12, %v316
  %vm318 = vcmp.eq.s32.totalorder %v13, %v316
  %vm319 = vcmp.eq.s32.totalorder %v14, %v316
  %vm320 = vcmp.eq.s32.totalorder %v15, %v316
  %vm321 = vcmp.eq.s32.totalorder %v16, %v316
  %vm322 = vcmp.eq.s32.totalorder %v17, %v316
  %vm323 = vcmp.eq.s32.totalorder %v18, %v316
  %vm324 = vcmp.eq.s32.totalorder %v19, %v316
  %vm325 = vcmp.eq.s32.totalorder %v20, %v316
  %vm326 = vcmp.eq.s32.totalorder %v21, %v316
  %vm327 = vcmp.eq.s32.totalorder %v22, %v316
  %vm328 = vcmp.eq.s32.totalorder %v23, %v316
  %vm329 = vcmp.eq.s32.totalorder %v24, %v316
  %vm330 = vcmp.eq.s32.totalorder %v25, %v316
  %vm331 = vcmp.eq.s32.totalorder %v26, %v316
  %vm332 = vcmp.eq.s32.totalorder %v27, %v316
  %v333 = vsel %vm317, 1, 0
  %v334 = vsel %vm318, 1, 0
  %v335 = vsel %vm319, 1, 0
  %v336 = vsel %vm320, 1, 0
  %v337 = vsel %vm321, 1, 0
  %v338 = vsel %vm322, 1, 0
  %v339 = vsel %vm323, 1, 0
  %v340 = vsel %vm324, 1, 0
  %v341 = vsel %vm325, 1, 0
  %v342 = vsel %vm326, 1, 0
  %v343 = vsel %vm327, 1, 0
  %v344 = vsel %vm328, 1, 0
  %v345 = vsel %vm329, 1, 0
  %v346 = vsel %vm330, 1, 0
  %v347 = vsel %vm331, 1, 0
  %v348 = vsel %vm332, 1, 0
  %v349 = vcvt.s32.f32 %v333
  %v350 = vcvt.s32.f32 %v334
  %v351 = vcvt.s32.f32 %v335
  %v352 = vcvt.s32.f32 %v336
  %v353 = vcvt.s32.f32 %v337
  %v354 = vcvt.s32.f32 %v338
  %v355 = vcvt.s32.f32 %v339
  %v356 = vcvt.s32.f32 %v340
  %v357 = vcvt.s32.f32 %v341
  %v358 = vcvt.s32.f32 %v342
  %v359 = vcvt.s32.f32 %v343
  %v360 = vcvt.s32.f32 %v344
  %v361 = vcvt.s32.f32 %v345
  %v362 = vcvt.s32.f32 %v346
  %v363 = vcvt.s32.f32 %v347
  %v364 = vcvt.s32.f32 %v348
  %v365 = vld [vmem:[%s1 + $0x10] sm:$0xff]
  %v366 = vld [vmem:[%s1 + $0x78] sm:$0xff]
  %v367 = vld [vmem:[%s1 + $0xe0] sm:$0xff]
  %v368 = vld [vmem:[%s1 + $0x148] sm:$0xff]
  %369 = vmatprep.subr.mxu0 0.0
  %370 = vmatpush1.msra.mxu0 %v364
  %371 = vmatprep.subr.mxu0 0.0
  %372 = vmatpush1.msra.mxu0 %v363
  %373 = vmatprep.subr.mxu0 0.0
  %374 = vmatpush1.msra.mxu0 %v362
  %375 = vmatprep.subr.mxu0 0.0
  %376 = vmatpush1.msra.mxu0 %v361
  %377 = vmatprep.subr.mxu0 0.0
  %378 = vmatpush1.msra.mxu0 %v360
  %379 = vmatprep.subr.mxu0 0.0
  %380 = vmatpush1.msra.mxu0 %v359
  %381 = vmatprep.subr.mxu0 0.0
  %382 = vmatpush1.msra.mxu0 %v358
  %383 = vmatprep.subr.mxu0 0.0
  %384 = vmatpush1.msra.mxu0 %v357
  %385 = vmatprep.subr.mxu0 0.0
  %386 = vmatpush1.msra.mxu0 %v356
  %387 = vmatprep.subr.mxu0 0.0
  %388 = vmatpush1.msra.mxu0 %v355
  %389 = vmatprep.subr.mxu0 0.0
  %390 = vmatpush1.msra.mxu0 %v354
  %391 = vmatprep.subr.mxu0 0.0
  %392 = vmatpush1.msra.mxu0 %v353
  %393 = vmatprep.subr.mxu0 0.0
  %394 = vmatpush1.msra.mxu0 %v352
  %395 = vmatprep.subr.mxu0 0.0
  %396 = vmatpush1.msra.mxu0 %v351
  %397 = vmatprep.subr.mxu0 0.0
  %398 = vmatpush1.msra.mxu0 %v350
  %399 = vmatprep.subr.mxu0 0.0
  %400 = vmatpush1.msra.mxu0 %v349
  %401 = vmatprep.subr.mxu0 0.0
  %402 = vmatpush2.msra.mxu0 0.0
  %403 = vmatprep.subr.mxu0 0.0
  %404 = vmatpush2.msra.mxu0 0.0
  %405 = vmatprep.subr.mxu0 0.0
  %406 = vmatpush2.msra.mxu0 0.0
  %407 = vmatprep.subr.mxu0 0.0
  %408 = vmatpush2.msra.mxu0 0.0
  %409 = vmatprep.subr.mxu0 0.0
  %410 = vmatpush2.msra.mxu0 0.0
  %411 = vmatprep.subr.mxu0 0.0
  %412 = vmatpush2.msra.mxu0 0.0
  %413 = vmatprep.subr.mxu0 0.0
  %414 = vmatpush2.msra.mxu0 0.0
  %415 = vmatprep.subr.mxu0 0.0
  %416 = vmatpush2.msra.mxu0 0.0
  %417 = vmatprep.subr.mxu0 0.0
  %418 = vmatpush2.msra.mxu0 0.0
  %419 = vmatprep.subr.mxu0 0.0
  %420 = vmatpush2.msra.mxu0 0.0
  %421 = vmatprep.subr.mxu0 0.0
  %422 = vmatpush2.msra.mxu0 0.0
  %423 = vmatprep.subr.mxu0 0.0
  %424 = vmatpush2.msra.mxu0 0.0
  %425 = vmatprep.subr.mxu0 0.0
  %426 = vmatpush2.msra.mxu0 0.0
  %427 = vmatprep.subr.mxu0 0.0
  %428 = vmatpush2.msra.mxu0 0.0
  %429 = vmatprep.subr.mxu0 0.0
  %430 = vmatpush2.msra.mxu0 0.0
  %431 = vmatprep.subr.mxu0 0.0
  %432 = vmatpush2.msra.mxu0 0.0
  %433 = vmatprep.mubr.f32.mxu0 0.0
  %434 = vmatmul.mubr.f32.gmra.mxu0 %v365
  %v435 = vpop.f32.mrf.mxu0
  %v436 = vadd.f32 0.0, %v435
  %v437 = vpop.f32.mrf.mxu0
  %438 = vmatprep.mubr.f32.mxu0 0.0
  %439 = vmatmul.mubr.f32.gmra.mxu0 %v366
  %v440 = vpop.f32.mrf.mxu0
  %v441 = vadd.f32 0.0, %v440
  %v442 = vpop.f32.mrf.mxu0
  %443 = vmatprep.mubr.f32.mxu0 0.0
  %444 = vmatmul.mubr.f32.gmra.mxu0 %v367
  %v445 = vpop.f32.mrf.mxu0
  %v446 = vadd.f32 0.0, %v445
  %v447 = vpop.f32.mrf.mxu0
  %448 = vmatprep.mubr.f32.mxu0 0.0
  %449 = vmatmul.mubr.f32.gmra.mxu0 %v368
  %v450 = vpop.f32.mrf.mxu0
  %v451 = vadd.f32 0.0, %v450
  %v452 = vpop.f32.mrf.mxu0
  %453 = vdwg.mxu0
  %v454 = vadd.f32 %v294, %v436
  %v455 = vadd.f32 %v299, %v441
  %v456 = vadd.f32 %v304, %v446
  %v457 = vadd.f32 %v309, %v451
  %v458 = vld [vmem:[%s0 + $0x3] sm:$0x1]
  %v459 = vlaneseq
  %v460 = vshrl.u32 %v459, 7
  %v461 = vsub.s32 0, %v460
  %v462 = vrot.slane %v458, %v461
  %vm463 = vcmp.eq.s32.totalorder %v12, %v462
  %vm464 = vcmp.eq.s32.totalorder %v13, %v462
  %vm465 = vcmp.eq.s32.totalorder %v14, %v462
  %vm466 = vcmp.eq.s32.totalorder %v15, %v462
  %vm467 = vcmp.eq.s32.totalorder %v16, %v462
  %vm468 = vcmp.eq.s32.totalorder %v17, %v462
  %vm469 = vcmp.eq.s32.totalorder %v18, %v462
  %vm470 = vcmp.eq.s32.totalorder %v19, %v462
  %vm471 = vcmp.eq.s32.totalorder %v20, %v462
  %vm472 = vcmp.eq.s32.totalorder %v21, %v462
  %vm473 = vcmp.eq.s32.totalorder %v22, %v462
  %vm474 = vcmp.eq.s32.totalorder %v23, %v462
  %vm475 = vcmp.eq.s32.totalorder %v24, %v462
  %vm476 = vcmp.eq.s32.totalorder %v25, %v462
  %vm477 = vcmp.eq.s32.totalorder %v26, %v462
  %vm478 = vcmp.eq.s32.totalorder %v27, %v462
  %v479 = vsel %vm463, 1, 0
  %v480 = vsel %vm464, 1, 0
  %v481 = vsel %vm465, 1, 0
  %v482 = vsel %vm466, 1, 0
  %v483 = vsel %vm467, 1, 0
  %v484 = vsel %vm468, 1, 0
  %v485 = vsel %vm469, 1, 0
  %v486 = vsel %vm470, 1, 0
  %v487 = vsel %vm471, 1, 0
  %v488 = vsel %vm472, 1, 0
  %v489 = vsel %vm473, 1, 0
  %v490 = vsel %vm474, 1, 0
  %v491 = vsel %vm475, 1, 0
  %v492 = vsel %vm476, 1, 0
  %v493 = vsel %vm477, 1, 0
  %v494 = vsel %vm478, 1, 0
  %v495 = vcvt.s32.f32 %v479
  %v496 = vcvt.s32.f32 %v480
  %v497 = vcvt.s32.f32 %v481
  %v498 = vcvt.s32.f32 %v482
  %v499 = vcvt.s32.f32 %v483
  %v500 = vcvt.s32.f32 %v484
  %v501 = vcvt.s32.f32 %v485
  %v502 = vcvt.s32.f32 %v486
  %v503 = vcvt.s32.f32 %v487
  %v504 = vcvt.s32.f32 %v488
  %v505 = vcvt.s32.f32 %v489
  %v506 = vcvt.s32.f32 %v490
  %v507 = vcvt.s32.f32 %v491
  %v508 = vcvt.s32.f32 %v492
  %v509 = vcvt.s32.f32 %v493
  %v510 = vcvt.s32.f32 %v494
  %v511 = vld [vmem:[%s1 + $0x18] sm:$0xff]
  %v512 = vld [vmem:[%s1 + $0x80] sm:$0xff]
  %v513 = vld [vmem:[%s1 + $0xe8] sm:$0xff]
  %v514 = vld [vmem:[%s1 + $0x150] sm:$0xff]
  %515 = vmatprep.subr.mxu0 0.0
  %516 = vmatpush1.msra.mxu0 %v510
  %517 = vmatprep.subr.mxu0 0.0
  %518 = vmatpush1.msra.mxu0 %v509
  %519 = vmatprep.subr.mxu0 0.0
  %520 = vmatpush1.msra.mxu0 %v508
  %521 = vmatprep.subr.mxu0 0.0
  %522 = vmatpush1.msra.mxu0 %v507
  %523 = vmatprep.subr.mxu0 0.0
  %524 = vmatpush1.msra.mxu0 %v506
  %525 = vmatprep.subr.mxu0 0.0
  %526 = vmatpush1.msra.mxu0 %v505
  %527 = vmatprep.subr.mxu0 0.0
  %528 = vmatpush1.msra.mxu0 %v504
  %529 = vmatprep.subr.mxu0 0.0
  %530 = vmatpush1.msra.mxu0 %v503
  %531 = vmatprep.subr.mxu0 0.0
  %532 = vmatpush1.msra.mxu0 %v502
  %533 = vmatprep.subr.mxu0 0.0
  %534 = vmatpush1.msra.mxu0 %v501
  %535 = vmatprep.subr.mxu0 0.0
  %536 = vmatpush1.msra.mxu0 %v500
  %537 = vmatprep.subr.mxu0 0.0
  %538 = vmatpush1.msra.mxu0 %v499
  %539 = vmatprep.subr.mxu0 0.0
  %540 = vmatpush1.msra.mxu0 %v498
  %541 = vmatprep.subr.mxu0 0.0
  %542 = vmatpush1.msra.mxu0 %v497
  %543 = vmatprep.subr.mxu0 0.0
  %544 = vmatpush1.msra.mxu0 %v496
  %545 = vmatprep.subr.mxu0 0.0
  %546 = vmatpush1.msra.mxu0 %v495
  %547 = vmatprep.subr.mxu0 0.0
  %548 = vmatpush2.msra.mxu0 0.0
  %549 = vmatprep.subr.mxu0 0.0
  %550 = vmatpush2.msra.mxu0 0.0
  %551 = vmatprep.subr.mxu0 0.0
  %552 = vmatpush2.msra.mxu0 0.0
  %553 = vmatprep.subr.mxu0 0.0
  %554 = vmatpush2.msra.mxu0 0.0
  %555 = vmatprep.subr.mxu0 0.0
  %556 = vmatpush2.msra.mxu0 0.0
  %557 = vmatprep.subr.mxu0 0.0
  %558 = vmatpush2.msra.mxu0 0.0
  %559 = vmatprep.subr.mxu0 0.0
  %560 = vmatpush2.msra.mxu0 0.0
  %561 = vmatprep.subr.mxu0 0.0
  %562 = vmatpush2.msra.mxu0 0.0
  %563 = vmatprep.subr.mxu0 0.0
  %564 = vmatpush2.msra.mxu0 0.0
  %565 = vmatprep.subr.mxu0 0.0
  %566 = vmatpush2.msra.mxu0 0.0
  %567 = vmatprep.subr.mxu0 0.0
  %568 = vmatpush2.msra.mxu0 0.0
  %569 = vmatprep.subr.mxu0 0.0
  %570 = vmatpush2.msra.mxu0 0.0
  %571 = vmatprep.subr.mxu0 0.0
  %572 = vmatpush2.msra.mxu0 0.0
  %573 = vmatprep.subr.mxu0 0.0
  %574 = vmatpush2.msra.mxu0 0.0
  %575 = vmatprep.subr.mxu0 0.0
  %576 = vmatpush2.msra.mxu0 0.0
  %577 = vmatprep.subr.mxu0 0.0
  %578 = vmatpush2.msra.mxu0 0.0
  %579 = vmatprep.mubr.f32.mxu0 0.0
  %580 = vmatmul.mubr.f32.gmra.mxu0 %v511
  %v581 = vpop.f32.mrf.mxu0
  %v582 = vadd.f32 0.0, %v581
  %v583 = vpop.f32.mrf.mxu0
  %584 = vmatprep.mubr.f32.mxu0 0.0
  %585 = vmatmul.mubr.f32.gmra.mxu0 %v512
  %v586 = vpop.f32.mrf.mxu0
  %v587 = vadd.f32 0.0, %v586
  %v588 = vpop.f32.mrf.mxu0
  %589 = vmatprep.mubr.f32.mxu0 0.0
  %590 = vmatmul.mubr.f32.gmra.mxu0 %v513
  %v591 = vpop.f32.mrf.mxu0
  %v592 = vadd.f32 0.0, %v591
  %v593 = vpop.f32.mrf.mxu0
  %594 = vmatprep.mubr.f32.mxu0 0.0
  %595 = vmatmul.mubr.f32.gmra.mxu0 %v514
  %v596 = vpop.f32.mrf.mxu0
  %v597 = vadd.f32 0.0, %v596
  %v598 = vpop.f32.mrf.mxu0
  %599 = vdwg.mxu0
  %v600 = vadd.f32 %v454, %v582
  %v601 = vadd.f32 %v455, %v587
  %v602 = vadd.f32 %v456, %v592
  %v603 = vadd.f32 %v457, %v597
  %v604 = vld [vmem:[%s0 + $0x4] sm:$0x1]
  %v605 = vlaneseq
  %v606 = vshrl.u32 %v605, 7
  %v607 = vsub.s32 0, %v606
  %v608 = vrot.slane %v604, %v607
  %vm609 = vcmp.eq.s32.totalorder %v12, %v608
  %vm610 = vcmp.eq.s32.totalorder %v13, %v608
  %vm611 = vcmp.eq.s32.totalorder %v14, %v608
  %vm612 = vcmp.eq.s32.totalorder %v15, %v608
  %vm613 = vcmp.eq.s32.totalorder %v16, %v608
  %vm614 = vcmp.eq.s32.totalorder %v17, %v608
  %vm615 = vcmp.eq.s32.totalorder %v18, %v608
  %vm616 = vcmp.eq.s32.totalorder %v19, %v608
  %vm617 = vcmp.eq.s32.totalorder %v20, %v608
  %vm618 = vcmp.eq.s32.totalorder %v21, %v608
  %vm619 = vcmp.eq.s32.totalorder %v22, %v608
  %vm620 = vcmp.eq.s32.totalorder %v23, %v608
  %vm621 = vcmp.eq.s32.totalorder %v24, %v608
  %vm622 = vcmp.eq.s32.totalorder %v25, %v608
  %vm623 = vcmp.eq.s32.totalorder %v26, %v608
  %vm624 = vcmp.eq.s32.totalorder %v27, %v608
  %v625 = vsel %vm609, 1, 0
  %v626 = vsel %vm610, 1, 0
  %v627 = vsel %vm611, 1, 0
  %v628 = vsel %vm612, 1, 0
  %v629 = vsel %vm613, 1, 0
  %v630 = vsel %vm614, 1, 0
  %v631 = vsel %vm615, 1, 0
  %v632 = vsel %vm616, 1, 0
  %v633 = vsel %vm617, 1, 0
  %v634 = vsel %vm618, 1, 0
  %v635 = vsel %vm619, 1, 0
  %v636 = vsel %vm620, 1, 0
  %v637 = vsel %vm621, 1, 0
  %v638 = vsel %vm622, 1, 0
  %v639 = vsel %vm623, 1, 0
  %v640 = vsel %vm624, 1, 0
  %v641 = vcvt.s32.f32 %v625
  %v642 = vcvt.s32.f32 %v626
  %v643 = vcvt.s32.f32 %v627
  %v644 = vcvt.s32.f32 %v628
  %v645 = vcvt.s32.f32 %v629
  %v646 = vcvt.s32.f32 %v630
  %v647 = vcvt.s32.f32 %v631
  %v648 = vcvt.s32.f32 %v632
  %v649 = vcvt.s32.f32 %v633
  %v650 = vcvt.s32.f32 %v634
  %v651 = vcvt.s32.f32 %v635
  %v652 = vcvt.s32.f32 %v636
  %v653 = vcvt.s32.f32 %v637
  %v654 = vcvt.s32.f32 %v638
  %v655 = vcvt.s32.f32 %v639
  %v656 = vcvt.s32.f32 %v640
  %v657 = vld [vmem:[%s1 + $0x20] sm:$0xff]
  %v658 = vld [vmem:[%s1 + $0x88] sm:$0xff]
  %v659 = vld [vmem:[%s1 + $0xf0] sm:$0xff]
  %v660 = vld [vmem:[%s1 + $0x158] sm:$0xff]
  %661 = vmatprep.subr.mxu0 0.0
  %662 = vmatpush1.msra.mxu0 %v656
  %663 = vmatprep.subr.mxu0 0.0
  %664 = vmatpush1.msra.mxu0 %v655
  %665 = vmatprep.subr.mxu0 0.0
  %666 = vmatpush1.msra.mxu0 %v654
  %667 = vmatprep.subr.mxu0 0.0
  %668 = vmatpush1.msra.mxu0 %v653
  %669 = vmatprep.subr.mxu0 0.0
  %670 = vmatpush1.msra.mxu0 %v652
  %671 = vmatprep.subr.mxu0 0.0
  %672 = vmatpush1.msra.mxu0 %v651
  %673 = vmatprep.subr.mxu0 0.0
  %674 = vmatpush1.msra.mxu0 %v650
  %675 = vmatprep.subr.mxu0 0.0
  %676 = vmatpush1.msra.mxu0 %v649
  %677 = vmatprep.subr.mxu0 0.0
  %678 = vmatpush1.msra.mxu0 %v648
  %679 = vmatprep.subr.mxu0 0.0
  %680 = vmatpush1.msra.mxu0 %v647
  %681 = vmatprep.subr.mxu0 0.0
  %682 = vmatpush1.msra.mxu0 %v646
  %683 = vmatprep.subr.mxu0 0.0
  %684 = vmatpush1.msra.mxu0 %v645
  %685 = vmatprep.subr.mxu0 0.0
  %686 = vmatpush1.msra.mxu0 %v644
  %687 = vmatprep.subr.mxu0 0.0
  %688 = vmatpush1.msra.mxu0 %v643
  %689 = vmatprep.subr.mxu0 0.0
  %690 = vmatpush1.msra.mxu0 %v642
  %691 = vmatprep.subr.mxu0 0.0
  %692 = vmatpush1.msra.mxu0 %v641
  %693 = vmatprep.subr.mxu0 0.0
  %694 = vmatpush2.msra.mxu0 0.0
  %695 = vmatprep.subr.mxu0 0.0
  %696 = vmatpush2.msra.mxu0 0.0
  %697 = vmatprep.subr.mxu0 0.0
  %698 = vmatpush2.msra.mxu0 0.0
  %699 = vmatprep.subr.mxu0 0.0
  %700 = vmatpush2.msra.mxu0 0.0
  %701 = vmatprep.subr.mxu0 0.0
  %702 = vmatpush2.msra.mxu0 0.0
  %703 = vmatprep.subr.mxu0 0.0
  %704 = vmatpush2.msra.mxu0 0.0
  %705 = vmatprep.subr.mxu0 0.0
  %706 = vmatpush2.msra.mxu0 0.0
  %707 = vmatprep.subr.mxu0 0.0
  %708 = vmatpush2.msra.mxu0 0.0
  %709 = vmatprep.subr.mxu0 0.0
  %710 = vmatpush2.msra.mxu0 0.0
  %711 = vmatprep.subr.mxu0 0.0
  %712 = vmatpush2.msra.mxu0 0.0
  %713 = vmatprep.subr.mxu0 0.0
  %714 = vmatpush2.msra.mxu0 0.0
  %715 = vmatprep.subr.mxu0 0.0
  %716 = vmatpush2.msra.mxu0 0.0
  %717 = vmatprep.subr.mxu0 0.0
  %718 = vmatpush2.msra.mxu0 0.0
  %719 = vmatprep.subr.mxu0 0.0
  %720 = vmatpush2.msra.mxu0 0.0
  %721 = vmatprep.subr.mxu0 0.0
  %722 = vmatpush2.msra.mxu0 0.0
  %723 = vmatprep.subr.mxu0 0.0
  %724 = vmatpush2.msra.mxu0 0.0
  %725 = vmatprep.mubr.f32.mxu0 0.0
  %726 = vmatmul.mubr.f32.gmra.mxu0 %v657
  %v727 = vpop.f32.mrf.mxu0
  %v728 = vadd.f32 0.0, %v727
  %v729 = vpop.f32.mrf.mxu0
  %730 = vmatprep.mubr.f32.mxu0 0.0
  %731 = vmatmul.mubr.f32.gmra.mxu0 %v658
  %v732 = vpop.f32.mrf.mxu0
  %v733 = vadd.f32 0.0, %v732
  %v734 = vpop.f32.mrf.mxu0
  %735 = vmatprep.mubr.f32.mxu0 0.0
  %736 = vmatmul.mubr.f32.gmra.mxu0 %v659
  %v737 = vpop.f32.mrf.mxu0
  %v738 = vadd.f32 0.0, %v737
  %v739 = vpop.f32.mrf.mxu0
  %740 = vmatprep.mubr.f32.mxu0 0.0
  %741 = vmatmul.mubr.f32.gmra.mxu0 %v660
  %v742 = vpop.f32.mrf.mxu0
  %v743 = vadd.f32 0.0, %v742
  %v744 = vpop.f32.mrf.mxu0
  %745 = vdwg.mxu0
  %v746 = vadd.f32 %v600, %v728
  %v747 = vadd.f32 %v601, %v733
  %v748 = vadd.f32 %v602, %v738
  %v749 = vadd.f32 %v603, %v743
  %v750 = vld [vmem:[%s0 + $0x5] sm:$0x1]
  %v751 = vlaneseq
  %v752 = vshrl.u32 %v751, 7
  %v753 = vsub.s32 0, %v752
  %v754 = vrot.slane %v750, %v753
  %vm755 = vcmp.eq.s32.totalorder %v12, %v754
  %vm756 = vcmp.eq.s32.totalorder %v13, %v754
  %vm757 = vcmp.eq.s32.totalorder %v14, %v754
  %vm758 = vcmp.eq.s32.totalorder %v15, %v754
  %vm759 = vcmp.eq.s32.totalorder %v16, %v754
  %vm760 = vcmp.eq.s32.totalorder %v17, %v754
  %vm761 = vcmp.eq.s32.totalorder %v18, %v754
  %vm762 = vcmp.eq.s32.totalorder %v19, %v754
  %vm763 = vcmp.eq.s32.totalorder %v20, %v754
  %vm764 = vcmp.eq.s32.totalorder %v21, %v754
  %vm765 = vcmp.eq.s32.totalorder %v22, %v754
  %vm766 = vcmp.eq.s32.totalorder %v23, %v754
  %vm767 = vcmp.eq.s32.totalorder %v24, %v754
  %vm768 = vcmp.eq.s32.totalorder %v25, %v754
  %vm769 = vcmp.eq.s32.totalorder %v26, %v754
  %vm770 = vcmp.eq.s32.totalorder %v27, %v754
  %v771 = vsel %vm755, 1, 0
  %v772 = vsel %vm756, 1, 0
  %v773 = vsel %vm757, 1, 0
  %v774 = vsel %vm758, 1, 0
  %v775 = vsel %vm759, 1, 0
  %v776 = vsel %vm760, 1, 0
  %v777 = vsel %vm761, 1, 0
  %v778 = vsel %vm762, 1, 0
  %v779 = vsel %vm763, 1, 0
  %v780 = vsel %vm764, 1, 0
  %v781 = vsel %vm765, 1, 0
  %v782 = vsel %vm766, 1, 0
  %v783 = vsel %vm767, 1, 0
  %v784 = vsel %vm768, 1, 0
  %v785 = vsel %vm769, 1, 0
  %v786 = vsel %vm770, 1, 0
  %v787 = vcvt.s32.f32 %v771
  %v788 = vcvt.s32.f32 %v772
  %v789 = vcvt.s32.f32 %v773
  %v790 = vcvt.s32.f32 %v774
  %v791 = vcvt.s32.f32 %v775
  %v792 = vcvt.s32.f32 %v776
  %v793 = vcvt.s32.f32 %v777
  %v794 = vcvt.s32.f32 %v778
  %v795 = vcvt.s32.f32 %v779
  %v796 = vcvt.s32.f32 %v780
  %v797 = vcvt.s32.f32 %v781
  %v798 = vcvt.s32.f32 %v782
  %v799 = vcvt.s32.f32 %v783
  %v800 = vcvt.s32.f32 %v784
  %v801 = vcvt.s32.f32 %v785
  %v802 = vcvt.s32.f32 %v786
  %v803 = vld [vmem:[%s1 + $0x28] sm:$0xff]
  %v804 = vld [vmem:[%s1 + $0x90] sm:$0xff]
  %v805 = vld [vmem:[%s1 + $0xf8] sm:$0xff]
  %v806 = vld [vmem:[%s1 + $0x160] sm:$0xff]
  %807 = vmatprep.subr.mxu0 0.0
  %808 = vmatpush1.msra.mxu0 %v802
  %809 = vmatprep.subr.mxu0 0.0
  %810 = vmatpush1.msra.mxu0 %v801
  %811 = vmatprep.subr.mxu0 0.0
  %812 = vmatpush1.msra.mxu0 %v800
  %813 = vmatprep.subr.mxu0 0.0
  %814 = vmatpush1.msra.mxu0 %v799
  %815 = vmatprep.subr.mxu0 0.0
  %816 = vmatpush1.msra.mxu0 %v798
  %817 = vmatprep.subr.mxu0 0.0
  %818 = vmatpush1.msra.mxu0 %v797
  %819 = vmatprep.subr.mxu0 0.0
  %820 = vmatpush1.msra.mxu0 %v796
  %821 = vmatprep.subr.mxu0 0.0
  %822 = vmatpush1.msra.mxu0 %v795
  %823 = vmatprep.subr.mxu0 0.0
  %824 = vmatpush1.msra.mxu0 %v794
  %825 = vmatprep.subr.mxu0 0.0
  %826 = vmatpush1.msra.mxu0 %v793
  %827 = vmatprep.subr.mxu0 0.0
  %828 = vmatpush1.msra.mxu0 %v792
  %829 = vmatprep.subr.mxu0 0.0
  %830 = vmatpush1.msra.mxu0 %v791
  %831 = vmatprep.subr.mxu0 0.0
  %832 = vmatpush1.msra.mxu0 %v790
  %833 = vmatprep.subr.mxu0 0.0
  %834 = vmatpush1.msra.mxu0 %v789
  %835 = vmatprep.subr.mxu0 0.0
  %836 = vmatpush1.msra.mxu0 %v788
  %837 = vmatprep.subr.mxu0 0.0
  %838 = vmatpush1.msra.mxu0 %v787
  %839 = vmatprep.subr.mxu0 0.0
  %840 = vmatpush2.msra.mxu0 0.0
  %841 = vmatprep.subr.mxu0 0.0
  %842 = vmatpush2.msra.mxu0 0.0
  %843 = vmatprep.subr.mxu0 0.0
  %844 = vmatpush2.msra.mxu0 0.0
  %845 = vmatprep.subr.mxu0 0.0
  %846 = vmatpush2.msra.mxu0 0.0
  %847 = vmatprep.subr.mxu0 0.0
  %848 = vmatpush2.msra.mxu0 0.0
  %849 = vmatprep.subr.mxu0 0.0
  %850 = vmatpush2.msra.mxu0 0.0
  %851 = vmatprep.subr.mxu0 0.0
  %852 = vmatpush2.msra.mxu0 0.0
  %853 = vmatprep.subr.mxu0 0.0
  %854 = vmatpush2.msra.mxu0 0.0
  %855 = vmatprep.subr.mxu0 0.0
  %856 = vmatpush2.msra.mxu0 0.0
  %857 = vmatprep.subr.mxu0 0.0
  %858 = vmatpush2.msra.mxu0 0.0
  %859 = vmatprep.subr.mxu0 0.0
  %860 = vmatpush2.msra.mxu0 0.0
  %861 = vmatprep.subr.mxu0 0.0
  %862 = vmatpush2.msra.mxu0 0.0
  %863 = vmatprep.subr.mxu0 0.0
  %864 = vmatpush2.msra.mxu0 0.0
  %865 = vmatprep.subr.mxu0 0.0
  %866 = vmatpush2.msra.mxu0 0.0
  %867 = vmatprep.subr.mxu0 0.0
  %868 = vmatpush2.msra.mxu0 0.0
  %869 = vmatprep.subr.mxu0 0.0
  %870 = vmatpush2.msra.mxu0 0.0
  %871 = vmatprep.mubr.f32.mxu0 0.0
  %872 = vmatmul.mubr.f32.gmra.mxu0 %v803
  %v873 = vpop.f32.mrf.mxu0
  %v874 = vadd.f32 0.0, %v873
  %v875 = vpop.f32.mrf.mxu0
  %876 = vmatprep.mubr.f32.mxu0 0.0
  %877 = vmatmul.mubr.f32.gmra.mxu0 %v804
  %v878 = vpop.f32.mrf.mxu0
  %v879 = vadd.f32 0.0, %v878
  %v880 = vpop.f32.mrf.mxu0
  %881 = vmatprep.mubr.f32.mxu0 0.0
  %882 = vmatmul.mubr.f32.gmra.mxu0 %v805
  %v883 = vpop.f32.mrf.mxu0
  %v884 = vadd.f32 0.0, %v883
  %v885 = vpop.f32.mrf.mxu0
  %886 = vmatprep.mubr.f32.mxu0 0.0
  %887 = vmatmul.mubr.f32.gmra.mxu0 %v806
  %v888 = vpop.f32.mrf.mxu0
  %v889 = vadd.f32 0.0, %v888
  %v890 = vpop.f32.mrf.mxu0
  %891 = vdwg.mxu0
  %v892 = vadd.f32 %v746, %v874
  %v893 = vadd.f32 %v747, %v879
  %v894 = vadd.f32 %v748, %v884
  %v895 = vadd.f32 %v749, %v889
  %v896 = vld [vmem:[%s0 + $0x6] sm:$0x1]
  %v897 = vlaneseq
  %v898 = vshrl.u32 %v897, 7
  %v899 = vsub.s32 0, %v898
  %v900 = vrot.slane %v896, %v899
  %vm901 = vcmp.eq.s32.totalorder %v12, %v900
  %vm902 = vcmp.eq.s32.totalorder %v13, %v900
  %vm903 = vcmp.eq.s32.totalorder %v14, %v900
  %vm904 = vcmp.eq.s32.totalorder %v15, %v900
  %vm905 = vcmp.eq.s32.totalorder %v16, %v900
  %vm906 = vcmp.eq.s32.totalorder %v17, %v900
  %vm907 = vcmp.eq.s32.totalorder %v18, %v900
  %vm908 = vcmp.eq.s32.totalorder %v19, %v900
  %vm909 = vcmp.eq.s32.totalorder %v20, %v900
  %vm910 = vcmp.eq.s32.totalorder %v21, %v900
  %vm911 = vcmp.eq.s32.totalorder %v22, %v900
  %vm912 = vcmp.eq.s32.totalorder %v23, %v900
  %vm913 = vcmp.eq.s32.totalorder %v24, %v900
  %vm914 = vcmp.eq.s32.totalorder %v25, %v900
  %vm915 = vcmp.eq.s32.totalorder %v26, %v900
  %vm916 = vcmp.eq.s32.totalorder %v27, %v900
  %v917 = vsel %vm901, 1, 0
  %v918 = vsel %vm902, 1, 0
  %v919 = vsel %vm903, 1, 0
  %v920 = vsel %vm904, 1, 0
  %v921 = vsel %vm905, 1, 0
  %v922 = vsel %vm906, 1, 0
  %v923 = vsel %vm907, 1, 0
  %v924 = vsel %vm908, 1, 0
  %v925 = vsel %vm909, 1, 0
  %v926 = vsel %vm910, 1, 0
  %v927 = vsel %vm911, 1, 0
  %v928 = vsel %vm912, 1, 0
  %v929 = vsel %vm913, 1, 0
  %v930 = vsel %vm914, 1, 0
  %v931 = vsel %vm915, 1, 0
  %v932 = vsel %vm916, 1, 0
  %v933 = vcvt.s32.f32 %v917
  %v934 = vcvt.s32.f32 %v918
  %v935 = vcvt.s32.f32 %v919
  %v936 = vcvt.s32.f32 %v920
  %v937 = vcvt.s32.f32 %v921
  %v938 = vcvt.s32.f32 %v922
  %v939 = vcvt.s32.f32 %v923
  %v940 = vcvt.s32.f32 %v924
  %v941 = vcvt.s32.f32 %v925
  %v942 = vcvt.s32.f32 %v926
  %v943 = vcvt.s32.f32 %v927
  %v944 = vcvt.s32.f32 %v928
  %v945 = vcvt.s32.f32 %v929
  %v946 = vcvt.s32.f32 %v930
  %v947 = vcvt.s32.f32 %v931
  %v948 = vcvt.s32.f32 %v932
  %v949 = vld [vmem:[%s1 + $0x30] sm:$0xff]
  %v950 = vld [vmem:[%s1 + $0x98] sm:$0xff]
  %v951 = vld [vmem:[%s1 + $0x100] sm:$0xff]
  %v952 = vld [vmem:[%s1 + $0x168] sm:$0xff]
  %953 = vmatprep.subr.mxu0 0.0
  %954 = vmatpush1.msra.mxu0 %v948
  %955 = vmatprep.subr.mxu0 0.0
  %956 = vmatpush1.msra.mxu0 %v947
  %957 = vmatprep.subr.mxu0 0.0
  %958 = vmatpush1.msra.mxu0 %v946
  %959 = vmatprep.subr.mxu0 0.0
  %960 = vmatpush1.msra.mxu0 %v945
  %961 = vmatprep.subr.mxu0 0.0
  %962 = vmatpush1.msra.mxu0 %v944
  %963 = vmatprep.subr.mxu0 0.0
  %964 = vmatpush1.msra.mxu0 %v943
  %965 = vmatprep.subr.mxu0 0.0
  %966 = vmatpush1.msra.mxu0 %v942
  %967 = vmatprep.subr.mxu0 0.0
  %968 = vmatpush1.msra.mxu0 %v941
  %969 = vmatprep.subr.mxu0 0.0
  %970 = vmatpush1.msra.mxu0 %v940
  %971 = vmatprep.subr.mxu0 0.0
  %972 = vmatpush1.msra.mxu0 %v939
  %973 = vmatprep.subr.mxu0 0.0
  %974 = vmatpush1.msra.mxu0 %v938
  %975 = vmatprep.subr.mxu0 0.0
  %976 = vmatpush1.msra.mxu0 %v937
  %977 = vmatprep.subr.mxu0 0.0
  %978 = vmatpush1.msra.mxu0 %v936
  %979 = vmatprep.subr.mxu0 0.0
  %980 = vmatpush1.msra.mxu0 %v935
  %981 = vmatprep.subr.mxu0 0.0
  %982 = vmatpush1.msra.mxu0 %v934
  %983 = vmatprep.subr.mxu0 0.0
  %984 = vmatpush1.msra.mxu0 %v933
  %985 = vmatprep.subr.mxu0 0.0
  %986 = vmatpush2.msra.mxu0 0.0
  %987 = vmatprep.subr.mxu0 0.0
  %988 = vmatpush2.msra.mxu0 0.0
  %989 = vmatprep.subr.mxu0 0.0
  %990 = vmatpush2.msra.mxu0 0.0
  %991 = vmatprep.subr.mxu0 0.0
  %992 = vmatpush2.msra.mxu0 0.0
  %993 = vmatprep.subr.mxu0 0.0
  %994 = vmatpush2.msra.mxu0 0.0
  %995 = vmatprep.subr.mxu0 0.0
  %996 = vmatpush2.msra.mxu0 0.0
  %997 = vmatprep.subr.mxu0 0.0
  %998 = vmatpush2.msra.mxu0 0.0
  %999 = vmatprep.subr.mxu0 0.0
  %1000 = vmatpush2.msra.mxu0 0.0
  %1001 = vmatprep.subr.mxu0 0.0
  %1002 = vmatpush2.msra.mxu0 0.0
  %1003 = vmatprep.subr.mxu0 0.0
  %1004 = vmatpush2.msra.mxu0 0.0
  %1005 = vmatprep.subr.mxu0 0.0
  %1006 = vmatpush2.msra.mxu0 0.0
  %1007 = vmatprep.subr.mxu0 0.0
  %1008 = vmatpush2.msra.mxu0 0.0
  %1009 = vmatprep.subr.mxu0 0.0
  %1010 = vmatpush2.msra.mxu0 0.0
  %1011 = vmatprep.subr.mxu0 0.0
  %1012 = vmatpush2.msra.mxu0 0.0
  %1013 = vmatprep.subr.mxu0 0.0
  %1014 = vmatpush2.msra.mxu0 0.0
  %1015 = vmatprep.subr.mxu0 0.0
  %1016 = vmatpush2.msra.mxu0 0.0
  %1017 = vmatprep.mubr.f32.mxu0 0.0
  %1018 = vmatmul.mubr.f32.gmra.mxu0 %v949
  %v1019 = vpop.f32.mrf.mxu0
  %v1020 = vadd.f32 0.0, %v1019
  %v1021 = vpop.f32.mrf.mxu0
  %1022 = vmatprep.mubr.f32.mxu0 0.0
  %1023 = vmatmul.mubr.f32.gmra.mxu0 %v950
  %v1024 = vpop.f32.mrf.mxu0
  %v1025 = vadd.f32 0.0, %v1024
  %v1026 = vpop.f32.mrf.mxu0
  %1027 = vmatprep.mubr.f32.mxu0 0.0
  %1028 = vmatmul.mubr.f32.gmra.mxu0 %v951
  %v1029 = vpop.f32.mrf.mxu0
  %v1030 = vadd.f32 0.0, %v1029
  %v1031 = vpop.f32.mrf.mxu0
  %1032 = vmatprep.mubr.f32.mxu0 0.0
  %1033 = vmatmul.mubr.f32.gmra.mxu0 %v952
  %v1034 = vpop.f32.mrf.mxu0
  %v1035 = vadd.f32 0.0, %v1034
  %v1036 = vpop.f32.mrf.mxu0
  %1037 = vdwg.mxu0
  %v1038 = vadd.f32 %v892, %v1020
  %v1039 = vadd.f32 %v893, %v1025
  %v1040 = vadd.f32 %v894, %v1030
  %v1041 = vadd.f32 %v895, %v1035
  %v1042 = vld [vmem:[%s0 + $0x7] sm:$0x1]
  %v1043 = vlaneseq
  %v1044 = vshrl.u32 %v1043, 7
  %v1045 = vsub.s32 0, %v1044
  %v1046 = vrot.slane %v1042, %v1045
  %vm1047 = vcmp.eq.s32.totalorder %v12, %v1046
  %vm1048 = vcmp.eq.s32.totalorder %v13, %v1046
  %vm1049 = vcmp.eq.s32.totalorder %v14, %v1046
  %vm1050 = vcmp.eq.s32.totalorder %v15, %v1046
  %vm1051 = vcmp.eq.s32.totalorder %v16, %v1046
  %vm1052 = vcmp.eq.s32.totalorder %v17, %v1046
  %vm1053 = vcmp.eq.s32.totalorder %v18, %v1046
  %vm1054 = vcmp.eq.s32.totalorder %v19, %v1046
  %vm1055 = vcmp.eq.s32.totalorder %v20, %v1046
  %vm1056 = vcmp.eq.s32.totalorder %v21, %v1046
  %vm1057 = vcmp.eq.s32.totalorder %v22, %v1046
  %vm1058 = vcmp.eq.s32.totalorder %v23, %v1046
  %vm1059 = vcmp.eq.s32.totalorder %v24, %v1046
  %vm1060 = vcmp.eq.s32.totalorder %v25, %v1046
  %vm1061 = vcmp.eq.s32.totalorder %v26, %v1046
  %vm1062 = vcmp.eq.s32.totalorder %v27, %v1046
  %v1063 = vsel %vm1047, 1, 0
  %v1064 = vsel %vm1048, 1, 0
  %v1065 = vsel %vm1049, 1, 0
  %v1066 = vsel %vm1050, 1, 0
  %v1067 = vsel %vm1051, 1, 0
  %v1068 = vsel %vm1052, 1, 0
  %v1069 = vsel %vm1053, 1, 0
  %v1070 = vsel %vm1054, 1, 0
  %v1071 = vsel %vm1055, 1, 0
  %v1072 = vsel %vm1056, 1, 0
  %v1073 = vsel %vm1057, 1, 0
  %v1074 = vsel %vm1058, 1, 0
  %v1075 = vsel %vm1059, 1, 0
  %v1076 = vsel %vm1060, 1, 0
  %v1077 = vsel %vm1061, 1, 0
  %v1078 = vsel %vm1062, 1, 0
  %v1079 = vcvt.s32.f32 %v1063
  %v1080 = vcvt.s32.f32 %v1064
  %v1081 = vcvt.s32.f32 %v1065
  %v1082 = vcvt.s32.f32 %v1066
  %v1083 = vcvt.s32.f32 %v1067
  %v1084 = vcvt.s32.f32 %v1068
  %v1085 = vcvt.s32.f32 %v1069
  %v1086 = vcvt.s32.f32 %v1070
  %v1087 = vcvt.s32.f32 %v1071
  %v1088 = vcvt.s32.f32 %v1072
  %v1089 = vcvt.s32.f32 %v1073
  %v1090 = vcvt.s32.f32 %v1074
  %v1091 = vcvt.s32.f32 %v1075
  %v1092 = vcvt.s32.f32 %v1076
  %v1093 = vcvt.s32.f32 %v1077
  %v1094 = vcvt.s32.f32 %v1078
  %v1095 = vld [vmem:[%s1 + $0x38] sm:$0xff]
  %v1096 = vld [vmem:[%s1 + $0xa0] sm:$0xff]
  %v1097 = vld [vmem:[%s1 + $0x108] sm:$0xff]
  %v1098 = vld [vmem:[%s1 + $0x170] sm:$0xff]
  %1099 = vmatprep.subr.mxu0 0.0
  %1100 = vmatpush1.msra.mxu0 %v1094
  %1101 = vmatprep.subr.mxu0 0.0
  %1102 = vmatpush1.msra.mxu0 %v1093
  %1103 = vmatprep.subr.mxu0 0.0
  %1104 = vmatpush1.msra.mxu0 %v1092
  %1105 = vmatprep.subr.mxu0 0.0
  %1106 = vmatpush1.msra.mxu0 %v1091
  %1107 = vmatprep.subr.mxu0 0.0
  %1108 = vmatpush1.msra.mxu0 %v1090
  %1109 = vmatprep.subr.mxu0 0.0
  %1110 = vmatpush1.msra.mxu0 %v1089
  %1111 = vmatprep.subr.mxu0 0.0
  %1112 = vmatpush1.msra.mxu0 %v1088
  %1113 = vmatprep.subr.mxu0 0.0
  %1114 = vmatpush1.msra.mxu0 %v1087
  %1115 = vmatprep.subr.mxu0 0.0
  %1116 = vmatpush1.msra.mxu0 %v1086
  %1117 = vmatprep.subr.mxu0 0.0
  %1118 = vmatpush1.msra.mxu0 %v1085
  %1119 = vmatprep.subr.mxu0 0.0
  %1120 = vmatpush1.msra.mxu0 %v1084
  %1121 = vmatprep.subr.mxu0 0.0
  %1122 = vmatpush1.msra.mxu0 %v1083
  %1123 = vmatprep.subr.mxu0 0.0
  %1124 = vmatpush1.msra.mxu0 %v1082
  %1125 = vmatprep.subr.mxu0 0.0
  %1126 = vmatpush1.msra.mxu0 %v1081
  %1127 = vmatprep.subr.mxu0 0.0
  %1128 = vmatpush1.msra.mxu0 %v1080
  %1129 = vmatprep.subr.mxu0 0.0
  %1130 = vmatpush1.msra.mxu0 %v1079
  %1131 = vmatprep.subr.mxu0 0.0
  %1132 = vmatpush2.msra.mxu0 0.0
  %1133 = vmatprep.subr.mxu0 0.0
  %1134 = vmatpush2.msra.mxu0 0.0
  %1135 = vmatprep.subr.mxu0 0.0
  %1136 = vmatpush2.msra.mxu0 0.0
  %1137 = vmatprep.subr.mxu0 0.0
  %1138 = vmatpush2.msra.mxu0 0.0
  %1139 = vmatprep.subr.mxu0 0.0
  %1140 = vmatpush2.msra.mxu0 0.0
  %1141 = vmatprep.subr.mxu0 0.0
  %1142 = vmatpush2.msra.mxu0 0.0
  %1143 = vmatprep.subr.mxu0 0.0
  %1144 = vmatpush2.msra.mxu0 0.0
  %1145 = vmatprep.subr.mxu0 0.0
  %1146 = vmatpush2.msra.mxu0 0.0
  %1147 = vmatprep.subr.mxu0 0.0
  %1148 = vmatpush2.msra.mxu0 0.0
  %1149 = vmatprep.subr.mxu0 0.0
  %1150 = vmatpush2.msra.mxu0 0.0
  %1151 = vmatprep.subr.mxu0 0.0
  %1152 = vmatpush2.msra.mxu0 0.0
  %1153 = vmatprep.subr.mxu0 0.0
  %1154 = vmatpush2.msra.mxu0 0.0
  %1155 = vmatprep.subr.mxu0 0.0
  %1156 = vmatpush2.msra.mxu0 0.0
  %1157 = vmatprep.subr.mxu0 0.0
  %1158 = vmatpush2.msra.mxu0 0.0
  %1159 = vmatprep.subr.mxu0 0.0
  %1160 = vmatpush2.msra.mxu0 0.0
  %1161 = vmatprep.subr.mxu0 0.0
  %1162 = vmatpush2.msra.mxu0 0.0
  %1163 = vmatprep.mubr.f32.mxu0 0.0
  %1164 = vmatmul.mubr.f32.gmra.mxu0 %v1095
  %v1165 = vpop.f32.mrf.mxu0
  %v1166 = vadd.f32 0.0, %v1165
  %v1167 = vpop.f32.mrf.mxu0
  %1168 = vmatprep.mubr.f32.mxu0 0.0
  %1169 = vmatmul.mubr.f32.gmra.mxu0 %v1096
  %v1170 = vpop.f32.mrf.mxu0
  %v1171 = vadd.f32 0.0, %v1170
  %v1172 = vpop.f32.mrf.mxu0
  %1173 = vmatprep.mubr.f32.mxu0 0.0
  %1174 = vmatmul.mubr.f32.gmra.mxu0 %v1097
  %v1175 = vpop.f32.mrf.mxu0
  %v1176 = vadd.f32 0.0, %v1175
  %v1177 = vpop.f32.mrf.mxu0
  %1178 = vmatprep.mubr.f32.mxu0 0.0
  %1179 = vmatmul.mubr.f32.gmra.mxu0 %v1098
  %v1180 = vpop.f32.mrf.mxu0
  %v1181 = vadd.f32 0.0, %v1180
  %v1182 = vpop.f32.mrf.mxu0
  %1183 = vdwg.mxu0
  %v1184 = vadd.f32 %v1038, %v1166
  %v1185 = vadd.f32 %v1039, %v1171
  %v1186 = vadd.f32 %v1040, %v1176
  %v1187 = vadd.f32 %v1041, %v1181
  %v1188 = vld [vmem:[%s0 + $0x8] sm:$0x1]
  %v1189 = vlaneseq
  %v1190 = vshrl.u32 %v1189, 7
  %v1191 = vsub.s32 0, %v1190
  %v1192 = vrot.slane %v1188, %v1191
  %vm1193 = vcmp.eq.s32.totalorder %v12, %v1192
  %vm1194 = vcmp.eq.s32.totalorder %v13, %v1192
  %vm1195 = vcmp.eq.s32.totalorder %v14, %v1192
  %vm1196 = vcmp.eq.s32.totalorder %v15, %v1192
  %vm1197 = vcmp.eq.s32.totalorder %v16, %v1192
  %vm1198 = vcmp.eq.s32.totalorder %v17, %v1192
  %vm1199 = vcmp.eq.s32.totalorder %v18, %v1192
  %vm1200 = vcmp.eq.s32.totalorder %v19, %v1192
  %vm1201 = vcmp.eq.s32.totalorder %v20, %v1192
  %vm1202 = vcmp.eq.s32.totalorder %v21, %v1192
  %vm1203 = vcmp.eq.s32.totalorder %v22, %v1192
  %vm1204 = vcmp.eq.s32.totalorder %v23, %v1192
  %vm1205 = vcmp.eq.s32.totalorder %v24, %v1192
  %vm1206 = vcmp.eq.s32.totalorder %v25, %v1192
  %vm1207 = vcmp.eq.s32.totalorder %v26, %v1192
  %vm1208 = vcmp.eq.s32.totalorder %v27, %v1192
  %v1209 = vsel %vm1193, 1, 0
  %v1210 = vsel %vm1194, 1, 0
  %v1211 = vsel %vm1195, 1, 0
  %v1212 = vsel %vm1196, 1, 0
  %v1213 = vsel %vm1197, 1, 0
  %v1214 = vsel %vm1198, 1, 0
  %v1215 = vsel %vm1199, 1, 0
  %v1216 = vsel %vm1200, 1, 0
  %v1217 = vsel %vm1201, 1, 0
  %v1218 = vsel %vm1202, 1, 0
  %v1219 = vsel %vm1203, 1, 0
  %v1220 = vsel %vm1204, 1, 0
  %v1221 = vsel %vm1205, 1, 0
  %v1222 = vsel %vm1206, 1, 0
  %v1223 = vsel %vm1207, 1, 0
  %v1224 = vsel %vm1208, 1, 0
  %v1225 = vcvt.s32.f32 %v1209
  %v1226 = vcvt.s32.f32 %v1210
  %v1227 = vcvt.s32.f32 %v1211
  %v1228 = vcvt.s32.f32 %v1212
  %v1229 = vcvt.s32.f32 %v1213
  %v1230 = vcvt.s32.f32 %v1214
  %v1231 = vcvt.s32.f32 %v1215
  %v1232 = vcvt.s32.f32 %v1216
  %v1233 = vcvt.s32.f32 %v1217
  %v1234 = vcvt.s32.f32 %v1218
  %v1235 = vcvt.s32.f32 %v1219
  %v1236 = vcvt.s32.f32 %v1220
  %v1237 = vcvt.s32.f32 %v1221
  %v1238 = vcvt.s32.f32 %v1222
  %v1239 = vcvt.s32.f32 %v1223
  %v1240 = vcvt.s32.f32 %v1224
  %v1241 = vld [vmem:[%s1 + $0x40] sm:$0xff]
  %v1242 = vld [vmem:[%s1 + $0xa8] sm:$0xff]
  %v1243 = vld [vmem:[%s1 + $0x110] sm:$0xff]
  %v1244 = vld [vmem:[%s1 + $0x178] sm:$0xff]
  %1245 = vmatprep.subr.mxu0 0.0
  %1246 = vmatpush1.msra.mxu0 %v1240
  %1247 = vmatprep.subr.mxu0 0.0
  %1248 = vmatpush1.msra.mxu0 %v1239
  %1249 = vmatprep.subr.mxu0 0.0
  %1250 = vmatpush1.msra.mxu0 %v1238
  %1251 = vmatprep.subr.mxu0 0.0
  %1252 = vmatpush1.msra.mxu0 %v1237
  %1253 = vmatprep.subr.mxu0 0.0
  %1254 = vmatpush1.msra.mxu0 %v1236
  %1255 = vmatprep.subr.mxu0 0.0
  %1256 = vmatpush1.msra.mxu0 %v1235
  %1257 = vmatprep.subr.mxu0 0.0
  %1258 = vmatpush1.msra.mxu0 %v1234
  %1259 = vmatprep.subr.mxu0 0.0
  %1260 = vmatpush1.msra.mxu0 %v1233
  %1261 = vmatprep.subr.mxu0 0.0
  %1262 = vmatpush1.msra.mxu0 %v1232
  %1263 = vmatprep.subr.mxu0 0.0
  %1264 = vmatpush1.msra.mxu0 %v1231
  %1265 = vmatprep.subr.mxu0 0.0
  %1266 = vmatpush1.msra.mxu0 %v1230
  %1267 = vmatprep.subr.mxu0 0.0
  %1268 = vmatpush1.msra.mxu0 %v1229
  %1269 = vmatprep.subr.mxu0 0.0
  %1270 = vmatpush1.msra.mxu0 %v1228
  %1271 = vmatprep.subr.mxu0 0.0
  %1272 = vmatpush1.msra.mxu0 %v1227
  %1273 = vmatprep.subr.mxu0 0.0
  %1274 = vmatpush1.msra.mxu0 %v1226
  %1275 = vmatprep.subr.mxu0 0.0
  %1276 = vmatpush1.msra.mxu0 %v1225
  %1277 = vmatprep.subr.mxu0 0.0
  %1278 = vmatpush2.msra.mxu0 0.0
  %1279 = vmatprep.subr.mxu0 0.0
  %1280 = vmatpush2.msra.mxu0 0.0
  %1281 = vmatprep.subr.mxu0 0.0
  %1282 = vmatpush2.msra.mxu0 0.0
  %1283 = vmatprep.subr.mxu0 0.0
  %1284 = vmatpush2.msra.mxu0 0.0
  %1285 = vmatprep.subr.mxu0 0.0
  %1286 = vmatpush2.msra.mxu0 0.0
  %1287 = vmatprep.subr.mxu0 0.0
  %1288 = vmatpush2.msra.mxu0 0.0
  %1289 = vmatprep.subr.mxu0 0.0
  %1290 = vmatpush2.msra.mxu0 0.0
  %1291 = vmatprep.subr.mxu0 0.0
  %1292 = vmatpush2.msra.mxu0 0.0
  %1293 = vmatprep.subr.mxu0 0.0
  %1294 = vmatpush2.msra.mxu0 0.0
  %1295 = vmatprep.subr.mxu0 0.0
  %1296 = vmatpush2.msra.mxu0 0.0
  %1297 = vmatprep.subr.mxu0 0.0
  %1298 = vmatpush2.msra.mxu0 0.0
  %1299 = vmatprep.subr.mxu0 0.0
  %1300 = vmatpush2.msra.mxu0 0.0
  %1301 = vmatprep.subr.mxu0 0.0
  %1302 = vmatpush2.msra.mxu0 0.0
  %1303 = vmatprep.subr.mxu0 0.0
  %1304 = vmatpush2.msra.mxu0 0.0
  %1305 = vmatprep.subr.mxu0 0.0
  %1306 = vmatpush2.msra.mxu0 0.0
  %1307 = vmatprep.subr.mxu0 0.0
  %1308 = vmatpush2.msra.mxu0 0.0
  %1309 = vmatprep.mubr.f32.mxu0 0.0
  %1310 = vmatmul.mubr.f32.gmra.mxu0 %v1241
  %v1311 = vpop.f32.mrf.mxu0
  %v1312 = vadd.f32 0.0, %v1311
  %v1313 = vpop.f32.mrf.mxu0
  %1314 = vmatprep.mubr.f32.mxu0 0.0
  %1315 = vmatmul.mubr.f32.gmra.mxu0 %v1242
  %v1316 = vpop.f32.mrf.mxu0
  %v1317 = vadd.f32 0.0, %v1316
  %v1318 = vpop.f32.mrf.mxu0
  %1319 = vmatprep.mubr.f32.mxu0 0.0
  %1320 = vmatmul.mubr.f32.gmra.mxu0 %v1243
  %v1321 = vpop.f32.mrf.mxu0
  %v1322 = vadd.f32 0.0, %v1321
  %v1323 = vpop.f32.mrf.mxu0
  %1324 = vmatprep.mubr.f32.mxu0 0.0
  %1325 = vmatmul.mubr.f32.gmra.mxu0 %v1244
  %v1326 = vpop.f32.mrf.mxu0
  %v1327 = vadd.f32 0.0, %v1326
  %v1328 = vpop.f32.mrf.mxu0
  %1329 = vdwg.mxu0
  %v1330 = vadd.f32 %v1184, %v1312
  %v1331 = vadd.f32 %v1185, %v1317
  %v1332 = vadd.f32 %v1186, %v1322
  %v1333 = vadd.f32 %v1187, %v1327
  %v1334 = vld [vmem:[%s0 + $0x9] sm:$0x1]
  %v1335 = vlaneseq
  %v1336 = vshrl.u32 %v1335, 7
  %v1337 = vsub.s32 0, %v1336
  %v1338 = vrot.slane %v1334, %v1337
  %vm1339 = vcmp.eq.s32.totalorder %v12, %v1338
  %vm1340 = vcmp.eq.s32.totalorder %v13, %v1338
  %vm1341 = vcmp.eq.s32.totalorder %v14, %v1338
  %vm1342 = vcmp.eq.s32.totalorder %v15, %v1338
  %vm1343 = vcmp.eq.s32.totalorder %v16, %v1338
  %vm1344 = vcmp.eq.s32.totalorder %v17, %v1338
  %vm1345 = vcmp.eq.s32.totalorder %v18, %v1338
  %vm1346 = vcmp.eq.s32.totalorder %v19, %v1338
  %vm1347 = vcmp.eq.s32.totalorder %v20, %v1338
  %vm1348 = vcmp.eq.s32.totalorder %v21, %v1338
  %vm1349 = vcmp.eq.s32.totalorder %v22, %v1338
  %vm1350 = vcmp.eq.s32.totalorder %v23, %v1338
  %vm1351 = vcmp.eq.s32.totalorder %v24, %v1338
  %vm1352 = vcmp.eq.s32.totalorder %v25, %v1338
  %vm1353 = vcmp.eq.s32.totalorder %v26, %v1338
  %vm1354 = vcmp.eq.s32.totalorder %v27, %v1338
  %v1355 = vsel %vm1339, 1, 0
  %v1356 = vsel %vm1340, 1, 0
  %v1357 = vsel %vm1341, 1, 0
  %v1358 = vsel %vm1342, 1, 0
  %v1359 = vsel %vm1343, 1, 0
  %v1360 = vsel %vm1344, 1, 0
  %v1361 = vsel %vm1345, 1, 0
  %v1362 = vsel %vm1346, 1, 0
  %v1363 = vsel %vm1347, 1, 0
  %v1364 = vsel %vm1348, 1, 0
  %v1365 = vsel %vm1349, 1, 0
  %v1366 = vsel %vm1350, 1, 0
  %v1367 = vsel %vm1351, 1, 0
  %v1368 = vsel %vm1352, 1, 0
  %v1369 = vsel %vm1353, 1, 0
  %v1370 = vsel %vm1354, 1, 0
  %v1371 = vcvt.s32.f32 %v1355
  %v1372 = vcvt.s32.f32 %v1356
  %v1373 = vcvt.s32.f32 %v1357
  %v1374 = vcvt.s32.f32 %v1358
  %v1375 = vcvt.s32.f32 %v1359
  %v1376 = vcvt.s32.f32 %v1360
  %v1377 = vcvt.s32.f32 %v1361
  %v1378 = vcvt.s32.f32 %v1362
  %v1379 = vcvt.s32.f32 %v1363
  %v1380 = vcvt.s32.f32 %v1364
  %v1381 = vcvt.s32.f32 %v1365
  %v1382 = vcvt.s32.f32 %v1366
  %v1383 = vcvt.s32.f32 %v1367
  %v1384 = vcvt.s32.f32 %v1368
  %v1385 = vcvt.s32.f32 %v1369
  %v1386 = vcvt.s32.f32 %v1370
  %v1387 = vld [vmem:[%s1 + $0x48] sm:$0xff]
  %v1388 = vld [vmem:[%s1 + $0xb0] sm:$0xff]
  %v1389 = vld [vmem:[%s1 + $0x118] sm:$0xff]
  %v1390 = vld [vmem:[%s1 + $0x180] sm:$0xff]
  %1391 = vmatprep.subr.mxu0 0.0
  %1392 = vmatpush1.msra.mxu0 %v1386
  %1393 = vmatprep.subr.mxu0 0.0
  %1394 = vmatpush1.msra.mxu0 %v1385
  %1395 = vmatprep.subr.mxu0 0.0
  %1396 = vmatpush1.msra.mxu0 %v1384
  %1397 = vmatprep.subr.mxu0 0.0
  %1398 = vmatpush1.msra.mxu0 %v1383
  %1399 = vmatprep.subr.mxu0 0.0
  %1400 = vmatpush1.msra.mxu0 %v1382
  %1401 = vmatprep.subr.mxu0 0.0
  %1402 = vmatpush1.msra.mxu0 %v1381
  %1403 = vmatprep.subr.mxu0 0.0
  %1404 = vmatpush1.msra.mxu0 %v1380
  %1405 = vmatprep.subr.mxu0 0.0
  %1406 = vmatpush1.msra.mxu0 %v1379
  %1407 = vmatprep.subr.mxu0 0.0
  %1408 = vmatpush1.msra.mxu0 %v1378
  %1409 = vmatprep.subr.mxu0 0.0
  %1410 = vmatpush1.msra.mxu0 %v1377
  %1411 = vmatprep.subr.mxu0 0.0
  %1412 = vmatpush1.msra.mxu0 %v1376
  %1413 = vmatprep.subr.mxu0 0.0
  %1414 = vmatpush1.msra.mxu0 %v1375
  %1415 = vmatprep.subr.mxu0 0.0
  %1416 = vmatpush1.msra.mxu0 %v1374
  %1417 = vmatprep.subr.mxu0 0.0
  %1418 = vmatpush1.msra.mxu0 %v1373
  %1419 = vmatprep.subr.mxu0 0.0
  %1420 = vmatpush1.msra.mxu0 %v1372
  %1421 = vmatprep.subr.mxu0 0.0
  %1422 = vmatpush1.msra.mxu0 %v1371
  %1423 = vmatprep.subr.mxu0 0.0
  %1424 = vmatpush2.msra.mxu0 0.0
  %1425 = vmatprep.subr.mxu0 0.0
  %1426 = vmatpush2.msra.mxu0 0.0
  %1427 = vmatprep.subr.mxu0 0.0
  %1428 = vmatpush2.msra.mxu0 0.0
  %1429 = vmatprep.subr.mxu0 0.0
  %1430 = vmatpush2.msra.mxu0 0.0
  %1431 = vmatprep.subr.mxu0 0.0
  %1432 = vmatpush2.msra.mxu0 0.0
  %1433 = vmatprep.subr.mxu0 0.0
  %1434 = vmatpush2.msra.mxu0 0.0
  %1435 = vmatprep.subr.mxu0 0.0
  %1436 = vmatpush2.msra.mxu0 0.0
  %1437 = vmatprep.subr.mxu0 0.0
  %1438 = vmatpush2.msra.mxu0 0.0
  %1439 = vmatprep.subr.mxu0 0.0
  %1440 = vmatpush2.msra.mxu0 0.0
  %1441 = vmatprep.subr.mxu0 0.0
  %1442 = vmatpush2.msra.mxu0 0.0
  %1443 = vmatprep.subr.mxu0 0.0
  %1444 = vmatpush2.msra.mxu0 0.0
  %1445 = vmatprep.subr.mxu0 0.0
  %1446 = vmatpush2.msra.mxu0 0.0
  %1447 = vmatprep.subr.mxu0 0.0
  %1448 = vmatpush2.msra.mxu0 0.0
  %1449 = vmatprep.subr.mxu0 0.0
  %1450 = vmatpush2.msra.mxu0 0.0
  %1451 = vmatprep.subr.mxu0 0.0
  %1452 = vmatpush2.msra.mxu0 0.0
  %1453 = vmatprep.subr.mxu0 0.0
  %1454 = vmatpush2.msra.mxu0 0.0
  %1455 = vmatprep.mubr.f32.mxu0 0.0
  %1456 = vmatmul.mubr.f32.gmra.mxu0 %v1387
  %v1457 = vpop.f32.mrf.mxu0
  %v1458 = vadd.f32 0.0, %v1457
  %v1459 = vpop.f32.mrf.mxu0
  %1460 = vmatprep.mubr.f32.mxu0 0.0
  %1461 = vmatmul.mubr.f32.gmra.mxu0 %v1388
  %v1462 = vpop.f32.mrf.mxu0
  %v1463 = vadd.f32 0.0, %v1462
  %v1464 = vpop.f32.mrf.mxu0
  %1465 = vmatprep.mubr.f32.mxu0 0.0
  %1466 = vmatmul.mubr.f32.gmra.mxu0 %v1389
  %v1467 = vpop.f32.mrf.mxu0
  %v1468 = vadd.f32 0.0, %v1467
  %v1469 = vpop.f32.mrf.mxu0
  %1470 = vmatprep.mubr.f32.mxu0 0.0
  %1471 = vmatmul.mubr.f32.gmra.mxu0 %v1390
  %v1472 = vpop.f32.mrf.mxu0
  %v1473 = vadd.f32 0.0, %v1472
  %v1474 = vpop.f32.mrf.mxu0
  %1475 = vdwg.mxu0
  %v1476 = vadd.f32 %v1330, %v1458
  %v1477 = vadd.f32 %v1331, %v1463
  %v1478 = vadd.f32 %v1332, %v1468
  %v1479 = vadd.f32 %v1333, %v1473
  %v1480 = vld [vmem:[%s0 + $0xa] sm:$0x1]
  %v1481 = vlaneseq
  %v1482 = vshrl.u32 %v1481, 7
  %v1483 = vsub.s32 0, %v1482
  %v1484 = vrot.slane %v1480, %v1483
  %vm1485 = vcmp.eq.s32.totalorder %v12, %v1484
  %vm1486 = vcmp.eq.s32.totalorder %v13, %v1484
  %vm1487 = vcmp.eq.s32.totalorder %v14, %v1484
  %vm1488 = vcmp.eq.s32.totalorder %v15, %v1484
  %vm1489 = vcmp.eq.s32.totalorder %v16, %v1484
  %vm1490 = vcmp.eq.s32.totalorder %v17, %v1484
  %vm1491 = vcmp.eq.s32.totalorder %v18, %v1484
  %vm1492 = vcmp.eq.s32.totalorder %v19, %v1484
  %vm1493 = vcmp.eq.s32.totalorder %v20, %v1484
  %vm1494 = vcmp.eq.s32.totalorder %v21, %v1484
  %vm1495 = vcmp.eq.s32.totalorder %v22, %v1484
  %vm1496 = vcmp.eq.s32.totalorder %v23, %v1484
  %vm1497 = vcmp.eq.s32.totalorder %v24, %v1484
  %vm1498 = vcmp.eq.s32.totalorder %v25, %v1484
  %vm1499 = vcmp.eq.s32.totalorder %v26, %v1484
  %vm1500 = vcmp.eq.s32.totalorder %v27, %v1484
  %v1501 = vsel %vm1485, 1, 0
  %v1502 = vsel %vm1486, 1, 0
  %v1503 = vsel %vm1487, 1, 0
  %v1504 = vsel %vm1488, 1, 0
  %v1505 = vsel %vm1489, 1, 0
  %v1506 = vsel %vm1490, 1, 0
  %v1507 = vsel %vm1491, 1, 0
  %v1508 = vsel %vm1492, 1, 0
  %v1509 = vsel %vm1493, 1, 0
  %v1510 = vsel %vm1494, 1, 0
  %v1511 = vsel %vm1495, 1, 0
  %v1512 = vsel %vm1496, 1, 0
  %v1513 = vsel %vm1497, 1, 0
  %v1514 = vsel %vm1498, 1, 0
  %v1515 = vsel %vm1499, 1, 0
  %v1516 = vsel %vm1500, 1, 0
  %v1517 = vcvt.s32.f32 %v1501
  %v1518 = vcvt.s32.f32 %v1502
  %v1519 = vcvt.s32.f32 %v1503
  %v1520 = vcvt.s32.f32 %v1504
  %v1521 = vcvt.s32.f32 %v1505
  %v1522 = vcvt.s32.f32 %v1506
  %v1523 = vcvt.s32.f32 %v1507
  %v1524 = vcvt.s32.f32 %v1508
  %v1525 = vcvt.s32.f32 %v1509
  %v1526 = vcvt.s32.f32 %v1510
  %v1527 = vcvt.s32.f32 %v1511
  %v1528 = vcvt.s32.f32 %v1512
  %v1529 = vcvt.s32.f32 %v1513
  %v1530 = vcvt.s32.f32 %v1514
  %v1531 = vcvt.s32.f32 %v1515
  %v1532 = vcvt.s32.f32 %v1516
  %v1533 = vld [vmem:[%s1 + $0x50] sm:$0xff]
  %v1534 = vld [vmem:[%s1 + $0xb8] sm:$0xff]
  %v1535 = vld [vmem:[%s1 + $0x120] sm:$0xff]
  %v1536 = vld [vmem:[%s1 + $0x188] sm:$0xff]
  %1537 = vmatprep.subr.mxu0 0.0
  %1538 = vmatpush1.msra.mxu0 %v1532
  %1539 = vmatprep.subr.mxu0 0.0
  %1540 = vmatpush1.msra.mxu0 %v1531
  %1541 = vmatprep.subr.mxu0 0.0
  %1542 = vmatpush1.msra.mxu0 %v1530
  %1543 = vmatprep.subr.mxu0 0.0
  %1544 = vmatpush1.msra.mxu0 %v1529
  %1545 = vmatprep.subr.mxu0 0.0
  %1546 = vmatpush1.msra.mxu0 %v1528
  %1547 = vmatprep.subr.mxu0 0.0
  %1548 = vmatpush1.msra.mxu0 %v1527
  %1549 = vmatprep.subr.mxu0 0.0
  %1550 = vmatpush1.msra.mxu0 %v1526
  %1551 = vmatprep.subr.mxu0 0.0
  %1552 = vmatpush1.msra.mxu0 %v1525
  %1553 = vmatprep.subr.mxu0 0.0
  %1554 = vmatpush1.msra.mxu0 %v1524
  %1555 = vmatprep.subr.mxu0 0.0
  %1556 = vmatpush1.msra.mxu0 %v1523
  %1557 = vmatprep.subr.mxu0 0.0
  %1558 = vmatpush1.msra.mxu0 %v1522
  %1559 = vmatprep.subr.mxu0 0.0
  %1560 = vmatpush1.msra.mxu0 %v1521
  %1561 = vmatprep.subr.mxu0 0.0
  %1562 = vmatpush1.msra.mxu0 %v1520
  %1563 = vmatprep.subr.mxu0 0.0
  %1564 = vmatpush1.msra.mxu0 %v1519
  %1565 = vmatprep.subr.mxu0 0.0
  %1566 = vmatpush1.msra.mxu0 %v1518
  %1567 = vmatprep.subr.mxu0 0.0
  %1568 = vmatpush1.msra.mxu0 %v1517
  %1569 = vmatprep.subr.mxu0 0.0
  %1570 = vmatpush2.msra.mxu0 0.0
  %1571 = vmatprep.subr.mxu0 0.0
  %1572 = vmatpush2.msra.mxu0 0.0
  %1573 = vmatprep.subr.mxu0 0.0
  %1574 = vmatpush2.msra.mxu0 0.0
  %1575 = vmatprep.subr.mxu0 0.0
  %1576 = vmatpush2.msra.mxu0 0.0
  %1577 = vmatprep.subr.mxu0 0.0
  %1578 = vmatpush2.msra.mxu0 0.0
  %1579 = vmatprep.subr.mxu0 0.0
  %1580 = vmatpush2.msra.mxu0 0.0
  %1581 = vmatprep.subr.mxu0 0.0
  %1582 = vmatpush2.msra.mxu0 0.0
  %1583 = vmatprep.subr.mxu0 0.0
  %1584 = vmatpush2.msra.mxu0 0.0
  %1585 = vmatprep.subr.mxu0 0.0
  %1586 = vmatpush2.msra.mxu0 0.0
  %1587 = vmatprep.subr.mxu0 0.0
  %1588 = vmatpush2.msra.mxu0 0.0
  %1589 = vmatprep.subr.mxu0 0.0
  %1590 = vmatpush2.msra.mxu0 0.0
  %1591 = vmatprep.subr.mxu0 0.0
  %1592 = vmatpush2.msra.mxu0 0.0
  %1593 = vmatprep.subr.mxu0 0.0
  %1594 = vmatpush2.msra.mxu0 0.0
  %1595 = vmatprep.subr.mxu0 0.0
  %1596 = vmatpush2.msra.mxu0 0.0
  %1597 = vmatprep.subr.mxu0 0.0
  %1598 = vmatpush2.msra.mxu0 0.0
  %1599 = vmatprep.subr.mxu0 0.0
  %1600 = vmatpush2.msra.mxu0 0.0
  %1601 = vmatprep.mubr.f32.mxu0 0.0
  %1602 = vmatmul.mubr.f32.gmra.mxu0 %v1533
  %v1603 = vpop.f32.mrf.mxu0
  %v1604 = vadd.f32 0.0, %v1603
  %v1605 = vpop.f32.mrf.mxu0
  %1606 = vmatprep.mubr.f32.mxu0 0.0
  %1607 = vmatmul.mubr.f32.gmra.mxu0 %v1534
  %v1608 = vpop.f32.mrf.mxu0
  %v1609 = vadd.f32 0.0, %v1608
  %v1610 = vpop.f32.mrf.mxu0
  %1611 = vmatprep.mubr.f32.mxu0 0.0
  %1612 = vmatmul.mubr.f32.gmra.mxu0 %v1535
  %v1613 = vpop.f32.mrf.mxu0
  %v1614 = vadd.f32 0.0, %v1613
  %v1615 = vpop.f32.mrf.mxu0
  %1616 = vmatprep.mubr.f32.mxu0 0.0
  %1617 = vmatmul.mubr.f32.gmra.mxu0 %v1536
  %v1618 = vpop.f32.mrf.mxu0
  %v1619 = vadd.f32 0.0, %v1618
  %v1620 = vpop.f32.mrf.mxu0
  %1621 = vdwg.mxu0
  %v1622 = vadd.f32 %v1476, %v1604
  %v1623 = vadd.f32 %v1477, %v1609
  %v1624 = vadd.f32 %v1478, %v1614
  %v1625 = vadd.f32 %v1479, %v1619
  %v1626 = vld [vmem:[%s0 + $0xb] sm:$0x1]
  %v1627 = vlaneseq
  %v1628 = vshrl.u32 %v1627, 7
  %v1629 = vsub.s32 0, %v1628
  %v1630 = vrot.slane %v1626, %v1629
  %vm1631 = vcmp.eq.s32.totalorder %v12, %v1630
  %vm1632 = vcmp.eq.s32.totalorder %v13, %v1630
  %vm1633 = vcmp.eq.s32.totalorder %v14, %v1630
  %vm1634 = vcmp.eq.s32.totalorder %v15, %v1630
  %vm1635 = vcmp.eq.s32.totalorder %v16, %v1630
  %vm1636 = vcmp.eq.s32.totalorder %v17, %v1630
  %vm1637 = vcmp.eq.s32.totalorder %v18, %v1630
  %vm1638 = vcmp.eq.s32.totalorder %v19, %v1630
  %vm1639 = vcmp.eq.s32.totalorder %v20, %v1630
  %vm1640 = vcmp.eq.s32.totalorder %v21, %v1630
  %vm1641 = vcmp.eq.s32.totalorder %v22, %v1630
  %vm1642 = vcmp.eq.s32.totalorder %v23, %v1630
  %vm1643 = vcmp.eq.s32.totalorder %v24, %v1630
  %vm1644 = vcmp.eq.s32.totalorder %v25, %v1630
  %vm1645 = vcmp.eq.s32.totalorder %v26, %v1630
  %vm1646 = vcmp.eq.s32.totalorder %v27, %v1630
  %v1647 = vsel %vm1631, 1, 0
  %v1648 = vsel %vm1632, 1, 0
  %v1649 = vsel %vm1633, 1, 0
  %v1650 = vsel %vm1634, 1, 0
  %v1651 = vsel %vm1635, 1, 0
  %v1652 = vsel %vm1636, 1, 0
  %v1653 = vsel %vm1637, 1, 0
  %v1654 = vsel %vm1638, 1, 0
  %v1655 = vsel %vm1639, 1, 0
  %v1656 = vsel %vm1640, 1, 0
  %v1657 = vsel %vm1641, 1, 0
  %v1658 = vsel %vm1642, 1, 0
  %v1659 = vsel %vm1643, 1, 0
  %v1660 = vsel %vm1644, 1, 0
  %v1661 = vsel %vm1645, 1, 0
  %v1662 = vsel %vm1646, 1, 0
  %v1663 = vcvt.s32.f32 %v1647
  %v1664 = vcvt.s32.f32 %v1648
  %v1665 = vcvt.s32.f32 %v1649
  %v1666 = vcvt.s32.f32 %v1650
  %v1667 = vcvt.s32.f32 %v1651
  %v1668 = vcvt.s32.f32 %v1652
  %v1669 = vcvt.s32.f32 %v1653
  %v1670 = vcvt.s32.f32 %v1654
  %v1671 = vcvt.s32.f32 %v1655
  %v1672 = vcvt.s32.f32 %v1656
  %v1673 = vcvt.s32.f32 %v1657
  %v1674 = vcvt.s32.f32 %v1658
  %v1675 = vcvt.s32.f32 %v1659
  %v1676 = vcvt.s32.f32 %v1660
  %v1677 = vcvt.s32.f32 %v1661
  %v1678 = vcvt.s32.f32 %v1662
  %v1679 = vld [vmem:[%s1 + $0x58] sm:$0xff]
  %v1680 = vld [vmem:[%s1 + $0xc0] sm:$0xff]
  %v1681 = vld [vmem:[%s1 + $0x128] sm:$0xff]
  %v1682 = vld [vmem:[%s1 + $0x190] sm:$0xff]
  %1683 = vmatprep.subr.mxu0 0.0
  %1684 = vmatpush1.msra.mxu0 %v1678
  %1685 = vmatprep.subr.mxu0 0.0
  %1686 = vmatpush1.msra.mxu0 %v1677
  %1687 = vmatprep.subr.mxu0 0.0
  %1688 = vmatpush1.msra.mxu0 %v1676
  %1689 = vmatprep.subr.mxu0 0.0
  %1690 = vmatpush1.msra.mxu0 %v1675
  %1691 = vmatprep.subr.mxu0 0.0
  %1692 = vmatpush1.msra.mxu0 %v1674
  %1693 = vmatprep.subr.mxu0 0.0
  %1694 = vmatpush1.msra.mxu0 %v1673
  %1695 = vmatprep.subr.mxu0 0.0
  %1696 = vmatpush1.msra.mxu0 %v1672
  %1697 = vmatprep.subr.mxu0 0.0
  %1698 = vmatpush1.msra.mxu0 %v1671
  %1699 = vmatprep.subr.mxu0 0.0
  %1700 = vmatpush1.msra.mxu0 %v1670
  %1701 = vmatprep.subr.mxu0 0.0
  %1702 = vmatpush1.msra.mxu0 %v1669
  %1703 = vmatprep.subr.mxu0 0.0
  %1704 = vmatpush1.msra.mxu0 %v1668
  %1705 = vmatprep.subr.mxu0 0.0
  %1706 = vmatpush1.msra.mxu0 %v1667
  %1707 = vmatprep.subr.mxu0 0.0
  %1708 = vmatpush1.msra.mxu0 %v1666
  %1709 = vmatprep.subr.mxu0 0.0
  %1710 = vmatpush1.msra.mxu0 %v1665
  %1711 = vmatprep.subr.mxu0 0.0
  %1712 = vmatpush1.msra.mxu0 %v1664
  %1713 = vmatprep.subr.mxu0 0.0
  %1714 = vmatpush1.msra.mxu0 %v1663
  %1715 = vmatprep.subr.mxu0 0.0
  %1716 = vmatpush2.msra.mxu0 0.0
  %1717 = vmatprep.subr.mxu0 0.0
  %1718 = vmatpush2.msra.mxu0 0.0
  %1719 = vmatprep.subr.mxu0 0.0
  %1720 = vmatpush2.msra.mxu0 0.0
  %1721 = vmatprep.subr.mxu0 0.0
  %1722 = vmatpush2.msra.mxu0 0.0
  %1723 = vmatprep.subr.mxu0 0.0
  %1724 = vmatpush2.msra.mxu0 0.0
  %1725 = vmatprep.subr.mxu0 0.0
  %1726 = vmatpush2.msra.mxu0 0.0
  %1727 = vmatprep.subr.mxu0 0.0
  %1728 = vmatpush2.msra.mxu0 0.0
  %1729 = vmatprep.subr.mxu0 0.0
  %1730 = vmatpush2.msra.mxu0 0.0
  %1731 = vmatprep.subr.mxu0 0.0
  %1732 = vmatpush2.msra.mxu0 0.0
  %1733 = vmatprep.subr.mxu0 0.0
  %1734 = vmatpush2.msra.mxu0 0.0
  %1735 = vmatprep.subr.mxu0 0.0
  %1736 = vmatpush2.msra.mxu0 0.0
  %1737 = vmatprep.subr.mxu0 0.0
  %1738 = vmatpush2.msra.mxu0 0.0
  %1739 = vmatprep.subr.mxu0 0.0
  %1740 = vmatpush2.msra.mxu0 0.0
  %1741 = vmatprep.subr.mxu0 0.0
  %1742 = vmatpush2.msra.mxu0 0.0
  %1743 = vmatprep.subr.mxu0 0.0
  %1744 = vmatpush2.msra.mxu0 0.0
  %1745 = vmatprep.subr.mxu0 0.0
  %1746 = vmatpush2.msra.mxu0 0.0
  %1747 = vmatprep.mubr.f32.mxu0 0.0
  %1748 = vmatmul.mubr.f32.gmra.mxu0 %v1679
  %v1749 = vpop.f32.mrf.mxu0
  %v1750 = vadd.f32 0.0, %v1749
  %v1751 = vpop.f32.mrf.mxu0
  %1752 = vmatprep.mubr.f32.mxu0 0.0
  %1753 = vmatmul.mubr.f32.gmra.mxu0 %v1680
  %v1754 = vpop.f32.mrf.mxu0
  %v1755 = vadd.f32 0.0, %v1754
  %v1756 = vpop.f32.mrf.mxu0
  %1757 = vmatprep.mubr.f32.mxu0 0.0
  %1758 = vmatmul.mubr.f32.gmra.mxu0 %v1681
  %v1759 = vpop.f32.mrf.mxu0
  %v1760 = vadd.f32 0.0, %v1759
  %v1761 = vpop.f32.mrf.mxu0
  %1762 = vmatprep.mubr.f32.mxu0 0.0
  %1763 = vmatmul.mubr.f32.gmra.mxu0 %v1682
  %v1764 = vpop.f32.mrf.mxu0
  %v1765 = vadd.f32 0.0, %v1764
  %v1766 = vpop.f32.mrf.mxu0
  %1767 = vdwg.mxu0
  %v1768 = vadd.f32 %v1622, %v1750
  %v1769 = vadd.f32 %v1623, %v1755
  %v1770 = vadd.f32 %v1624, %v1760
  %v1771 = vadd.f32 %v1625, %v1765
  %v1772 = vld [vmem:[%s0 + $0xc] sm:$0x1]
  %v1773 = vlaneseq
  %v1774 = vshrl.u32 %v1773, 7
  %v1775 = vsub.s32 0, %v1774
  %v1776 = vrot.slane %v1772, %v1775
  %vm1777 = vcmp.eq.s32.totalorder %v12, %v1776
  %vm1778 = vcmp.eq.s32.totalorder %v13, %v1776
  %vm1779 = vcmp.eq.s32.totalorder %v14, %v1776
  %vm1780 = vcmp.eq.s32.totalorder %v15, %v1776
  %vm1781 = vcmp.eq.s32.totalorder %v16, %v1776
  %vm1782 = vcmp.eq.s32.totalorder %v17, %v1776
  %vm1783 = vcmp.eq.s32.totalorder %v18, %v1776
  %vm1784 = vcmp.eq.s32.totalorder %v19, %v1776
  %vm1785 = vcmp.eq.s32.totalorder %v20, %v1776
  %vm1786 = vcmp.eq.s32.totalorder %v21, %v1776
  %vm1787 = vcmp.eq.s32.totalorder %v22, %v1776
  %vm1788 = vcmp.eq.s32.totalorder %v23, %v1776
  %vm1789 = vcmp.eq.s32.totalorder %v24, %v1776
  %vm1790 = vcmp.eq.s32.totalorder %v25, %v1776
  %vm1791 = vcmp.eq.s32.totalorder %v26, %v1776
  %vm1792 = vcmp.eq.s32.totalorder %v27, %v1776
  %v1793 = vsel %vm1777, 1, 0
  %v1794 = vsel %vm1778, 1, 0
  %v1795 = vsel %vm1779, 1, 0
  %v1796 = vsel %vm1780, 1, 0
  %v1797 = vsel %vm1781, 1, 0
  %v1798 = vsel %vm1782, 1, 0
  %v1799 = vsel %vm1783, 1, 0
  %v1800 = vsel %vm1784, 1, 0
  %v1801 = vsel %vm1785, 1, 0
  %v1802 = vsel %vm1786, 1, 0
  %v1803 = vsel %vm1787, 1, 0
  %v1804 = vsel %vm1788, 1, 0
  %v1805 = vsel %vm1789, 1, 0
  %v1806 = vsel %vm1790, 1, 0
  %v1807 = vsel %vm1791, 1, 0
  %v1808 = vsel %vm1792, 1, 0
  %v1809 = vcvt.s32.f32 %v1793
  %v1810 = vcvt.s32.f32 %v1794
  %v1811 = vcvt.s32.f32 %v1795
  %v1812 = vcvt.s32.f32 %v1796
  %v1813 = vcvt.s32.f32 %v1797
  %v1814 = vcvt.s32.f32 %v1798
  %v1815 = vcvt.s32.f32 %v1799
  %v1816 = vcvt.s32.f32 %v1800
  %v1817 = vcvt.s32.f32 %v1801
  %v1818 = vcvt.s32.f32 %v1802
  %v1819 = vcvt.s32.f32 %v1803
  %v1820 = vcvt.s32.f32 %v1804
  %v1821 = vcvt.s32.f32 %v1805
  %v1822 = vcvt.s32.f32 %v1806
  %v1823 = vcvt.s32.f32 %v1807
  %v1824 = vcvt.s32.f32 %v1808
  %v1825 = vld [vmem:[%s1 + $0x60] sm:$0xff]
  %v1826 = vld [vmem:[%s1 + $0xc8] sm:$0xff]
  %v1827 = vld [vmem:[%s1 + $0x130] sm:$0xff]
  %v1828 = vld [vmem:[%s1 + $0x198] sm:$0xff]
  %1829 = vmatprep.subr.mxu0 0.0
  %1830 = vmatpush1.msra.mxu0 %v1824
  %1831 = vmatprep.subr.mxu0 0.0
  %1832 = vmatpush1.msra.mxu0 %v1823
  %1833 = vmatprep.subr.mxu0 0.0
  %1834 = vmatpush1.msra.mxu0 %v1822
  %1835 = vmatprep.subr.mxu0 0.0
  %1836 = vmatpush1.msra.mxu0 %v1821
  %1837 = vmatprep.subr.mxu0 0.0
  %1838 = vmatpush1.msra.mxu0 %v1820
  %1839 = vmatprep.subr.mxu0 0.0
  %1840 = vmatpush1.msra.mxu0 %v1819
  %1841 = vmatprep.subr.mxu0 0.0
  %1842 = vmatpush1.msra.mxu0 %v1818
  %1843 = vmatprep.subr.mxu0 0.0
  %1844 = vmatpush1.msra.mxu0 %v1817
  %1845 = vmatprep.subr.mxu0 0.0
  %1846 = vmatpush1.msra.mxu0 %v1816
  %1847 = vmatprep.subr.mxu0 0.0
  %1848 = vmatpush1.msra.mxu0 %v1815
  %1849 = vmatprep.subr.mxu0 0.0
  %1850 = vmatpush1.msra.mxu0 %v1814
  %1851 = vmatprep.subr.mxu0 0.0
  %1852 = vmatpush1.msra.mxu0 %v1813
  %1853 = vmatprep.subr.mxu0 0.0
  %1854 = vmatpush1.msra.mxu0 %v1812
  %1855 = vmatprep.subr.mxu0 0.0
  %1856 = vmatpush1.msra.mxu0 %v1811
  %1857 = vmatprep.subr.mxu0 0.0
  %1858 = vmatpush1.msra.mxu0 %v1810
  %1859 = vmatprep.subr.mxu0 0.0
  %1860 = vmatpush1.msra.mxu0 %v1809
  %1861 = vmatprep.subr.mxu0 0.0
  %1862 = vmatpush2.msra.mxu0 0.0
  %1863 = vmatprep.subr.mxu0 0.0
  %1864 = vmatpush2.msra.mxu0 0.0
  %1865 = vmatprep.subr.mxu0 0.0
  %1866 = vmatpush2.msra.mxu0 0.0
  %1867 = vmatprep.subr.mxu0 0.0
  %1868 = vmatpush2.msra.mxu0 0.0
  %1869 = vmatprep.subr.mxu0 0.0
  %1870 = vmatpush2.msra.mxu0 0.0
  %1871 = vmatprep.subr.mxu0 0.0
  %1872 = vmatpush2.msra.mxu0 0.0
  %1873 = vmatprep.subr.mxu0 0.0
  %1874 = vmatpush2.msra.mxu0 0.0
  %1875 = vmatprep.subr.mxu0 0.0
  %1876 = vmatpush2.msra.mxu0 0.0
  %1877 = vmatprep.subr.mxu0 0.0
  %1878 = vmatpush2.msra.mxu0 0.0
  %1879 = vmatprep.subr.mxu0 0.0
  %1880 = vmatpush2.msra.mxu0 0.0
  %1881 = vmatprep.subr.mxu0 0.0
  %1882 = vmatpush2.msra.mxu0 0.0
  %1883 = vmatprep.subr.mxu0 0.0
  %1884 = vmatpush2.msra.mxu0 0.0
  %1885 = vmatprep.subr.mxu0 0.0
  %1886 = vmatpush2.msra.mxu0 0.0
  %1887 = vmatprep.subr.mxu0 0.0
  %1888 = vmatpush2.msra.mxu0 0.0
  %1889 = vmatprep.subr.mxu0 0.0
  %1890 = vmatpush2.msra.mxu0 0.0
  %1891 = vmatprep.subr.mxu0 0.0
  %1892 = vmatpush2.msra.mxu0 0.0
  %1893 = vmatprep.mubr.f32.mxu0 0.0
  %1894 = vmatmul.mubr.f32.gmra.mxu0 %v1825
  %v1895 = vpop.f32.mrf.mxu0
  %v1896 = vadd.f32 0.0, %v1895
  %v1897 = vpop.f32.mrf.mxu0
  %1898 = vmatprep.mubr.f32.mxu0 0.0
  %1899 = vmatmul.mubr.f32.gmra.mxu0 %v1826
  %v1900 = vpop.f32.mrf.mxu0
  %v1901 = vadd.f32 0.0, %v1900
  %v1902 = vpop.f32.mrf.mxu0
  %1903 = vmatprep.mubr.f32.mxu0 0.0
  %1904 = vmatmul.mubr.f32.gmra.mxu0 %v1827
  %v1905 = vpop.f32.mrf.mxu0
  %v1906 = vadd.f32 0.0, %v1905
  %v1907 = vpop.f32.mrf.mxu0
  %1908 = vmatprep.mubr.f32.mxu0 0.0
  %1909 = vmatmul.mubr.f32.gmra.mxu0 %v1828
  %v1910 = vpop.f32.mrf.mxu0
  %v1911 = vadd.f32 0.0, %v1910
  %v1912 = vpop.f32.mrf.mxu0
  %1913 = vdwg.mxu0
  %v1914 = vadd.f32 %v1768, %v1896
  %v1915 = vadd.f32 %v1769, %v1901
  %v1916 = vadd.f32 %v1770, %v1906
  %v1917 = vadd.f32 %v1771, %v1911
  %1918 = vst [vmem:[%s2] sm:$0xff] %v1914
  %1919 = vst [vmem:[%s2 + $0x8] sm:$0xff] %v1915
  %1920 = vst [vmem:[%s2 + $0x10] sm:$0xff] %v1916
  %1921 = vst [vmem:[%s2 + $0x18] sm:$0xff] %v1917
  // Predicated region
  $region10: #{node_embed.1} parent=0 // pred_check
    _
  $region11: #{node_embed.1} parent=0 // pred_check_branch
    %1923 = sbr.rel (0) target = $region13
  $region12: #{node_embed.1} parent=0 // pred_region
    _
  $region13: #{node_embed.1} parent=0 // pred_fallthru
    _
  // Predicated region
  $region14: #{node_embed.1} parent=0 // pred_check
    _
  $region15: #{node_embed.1} parent=0 // pred_check_branch
    %1925 = sbr.rel (0) target = $region17
  $region16: #{node_embed.1} parent=0 // pred_region
    _
  $region17: #{node_embed.1} parent=0 // pred_fallthru
    _

</llo_original>
